<compile_context>
chip_gen: v7x
topology: tpu7x:2x2x1
jax: 0.10.0
libtpu: 0.0.40
codegen_flags: <defaults>
</compile_context>

<pallas_src>
import jax
import jax.numpy as jnp
from jax.experimental import pallas as pl
from jax.experimental.pallas import tpu as pltpu


# ---------------- configuration (small synthetic shapes) ----------------
B = 2          # batch
N = 8          # tokens
DIM = 32       # embed dim
NUM_HEADS = 4
HEAD_DIM = DIM // NUM_HEADS
MLP_HIDDEN = int(DIM * 4.0)
SCALE = HEAD_DIM ** (-0.5)
LN_EPS = 1e-5

# Set to jnp.bfloat16 on v6e/v7x for MXU throughput (accumulation stays f32 via
# preferred_element_type).  Kept f32 here so the kernel matches the f32 PyTorch
# semantics within the 5e-4 tolerance.
MATMUL_DTYPE = jnp.float32


def _ln_no_affine(v):
    # LayerNorm with the affine (gamma/beta) folded into the following matmul.
    mu = jnp.mean(v, axis=-1, keepdims=True)
    var = jnp.mean((v - mu) ** 2, axis=-1, keepdims=True)
    return (v - mu) * jax.lax.rsqrt(var + LN_EPS)


def _gelu_exact(x):
    # torch.nn.GELU default: exact erf formulation.
    # (tanh-approx GELU would move this to the EUP slot but loosens the match.)
    return 0.5 * x * (1.0 + jax.lax.erf(x / jnp.sqrt(2.0).astype(x.dtype)))


def _mm(a, b):
    # 2-D matmul with optional bf16 operands, f32 accumulation on the MXU.
    return jnp.dot(a.astype(MATMUL_DTYPE), b.astype(MATMUL_DTYPE),
                   preferred_element_type=jnp.float32)


def gated_block_kernel(
    alpha_ref,                      # (1,1) f32 in SMEM: SCALE / temp
    x_ref,                          # (N, C)       one batch element
    wqkv_ref, bqkv_ref,             # (C, 3C), (1, 3C)   (LN1 affine folded in)
    wproj_ref, bproj_ref,           # (C, C), (1, C)
    wfc1_ref, bfc1_ref,             # (C, H), (1, H)     (LN2 affine folded in)
    wfc2_ref, bfc2_ref,             # (H, C), (1, C)
    o_ref,                          # (N, C)
):
    x = x_ref[...]
    alpha = alpha_ref[0, 0]                 # SCALE / temp, folded once

    # ---- attention branch ----
    xn = _ln_no_affine(x)
    qkv = _mm(xn, wqkv_ref[...]) + bqkv_ref[...]          # (N, 3C), one QKV matmul
    qkv = qkv.reshape(N, 3 * NUM_HEADS, HEAD_DIM)          # (N, 3H, hd)
    qkv_h = pltpu.einshape("ngd->gnd", qkv)                # (3H, N, hd) head-major
    q = qkv_h[:NUM_HEADS]                                  # (H, N, hd)
    k = qkv_h[NUM_HEADS:2 * NUM_HEADS]
    v = qkv_h[2 * NUM_HEADS:]

    # Head-batched score / softmax / PV (flash-attention einsum patterns).
    s = jnp.einsum("hqd,hkd->hqk",
                   q.astype(MATMUL_DTYPE), k.astype(MATMUL_DTYPE),
                   preferred_element_type=jnp.float32) * alpha
    s = s - jnp.max(s, axis=-1, keepdims=True)
    p = jnp.exp(s)
    p = p * pl.reciprocal(jnp.sum(p, axis=-1, keepdims=True), approx=True)
    ho = jnp.einsum("hqk,hkd->hqd",
                    p.astype(MATMUL_DTYPE), v.astype(MATMUL_DTYPE),
                    preferred_element_type=jnp.float32)    # (H, N, hd)

    ho = pltpu.einshape("hnd->nhd", ho).reshape(N, DIM)     # (N, C), lane-minor h,d
    attn_out = _mm(ho, wproj_ref[...]) + bproj_ref[...]     # single output projection

    x1 = x + attn_out                                       # residual 1

    # ---- MLP branch ----
    xn2 = _ln_no_affine(x1)
    h1 = _mm(xn2, wfc1_ref[...]) + bfc1_ref[...]
    h1 = _gelu_exact(h1)
    h2 = _mm(h1, wfc2_ref[...]) + bfc2_ref[...]

    o_ref[...] = (x1 + h2).astype(o_ref.dtype)              # residual 2
    # TODO(synk): at real ViT dims, zero-pad C to a multiple of 128 (lane-dense
    # stores / full MXU columns) and tile the MLP hidden dim for v7x VMEM.


def gated_block(x, params, temp=1.0):
    """x: (B, N, C) float32.  params: dict of pre-transposed (in, out) weights."""
    Bv, Nv, Cv = x.shape
    alpha = jnp.full((1, 1), SCALE / temp, jnp.float32)     # fold scale & 1/temp

    # Fold LayerNorm affine params into the adjacent matmuls (one-time, host side):
    #   LN(x) @ W + b  ==  norm(x) @ (diag(g) @ W) + (beta @ W + b)
    w_qkv = params["w_qkv"] * params["n1_g"].reshape(Cv, 1)
    b_qkv = params["n1_b"] @ params["w_qkv"]                            # (1, 3C)
    w_fc1 = params["w_fc1"] * params["n2_g"].reshape(Cv, 1)
    b_fc1 = params["b_fc1"] + params["n2_b"] @ params["w_fc1"]          # (1, H)

    # Whole-array, single-buffered resident operands (no pointless double-buffer).
    vmem = pl.BlockSpec(memory_space=pltpu.MemorySpace.VMEM)
    smem = pl.BlockSpec(memory_space=pltpu.MemorySpace.SMEM)

    return pl.pallas_call(
        gated_block_kernel,
        out_shape=jax.ShapeDtypeStruct((Bv, Nv, Cv), jnp.float32),
        grid=(Bv,),
        in_specs=[
            smem,                                               # alpha
            pl.BlockSpec((None, Nv, Cv), lambda b: (b, 0, 0)),  # x, one batch elem/step
            vmem, vmem,                                         # W_qkv, b_qkv (folded LN1)
            vmem, vmem,                                         # W_proj, b_proj
            vmem, vmem,                                         # W_fc1, b_fc1 (folded LN2)
            vmem, vmem,                                         # W_fc2, b_fc2
        ],
        out_specs=pl.BlockSpec((None, Nv, Cv), lambda b: (b, 0, 0)),
        compiler_params=pltpu.CompilerParams(
            dimension_semantics=("parallel",)),   # shards batch over v7x's 2 TCs
    )(
        alpha, x,
        w_qkv, b_qkv,
        params["w_proj"], params["b_proj"],
        w_fc1, b_fc1,
        params["w_fc2"], params["b_fc2"],
    )


# ---------------- pure-JAX reference (mirrors the PyTorch forward) ----------------
def gated_block_ref(x, p, temp=1.0):
    def ln(v, g, b):
        mu = jnp.mean(v, axis=-1, keepdims=True)
        var = jnp.mean((v - mu) ** 2, axis=-1, keepdims=True)
        return (v - mu) * jax.lax.rsqrt(var + LN_EPS) * g + b

    Bv, Nv, Cv = x.shape
    xn = ln(x, p["n1_g"][0], p["n1_b"][0])
    qkv = xn @ p["w_qkv"]                                    # (B, N, 3C)
    qkv = qkv.reshape(Bv, Nv, 3, NUM_HEADS, HEAD_DIM).transpose(2, 0, 3, 1, 4)
    q, k, v = qkv[0], qkv[1], qkv[2]                         # (B, h, N, hd)
    attn = jnp.einsum("bhnd,bhmd->bhnm", q, k) * SCALE / temp
    attn = jax.nn.softmax(attn, axis=-1)
    o = jnp.einsum("bhnm,bhmd->bhnd", attn, v).transpose(0, 2, 1, 3).reshape(Bv, Nv, Cv)
    o = o @ p["w_proj"] + p["b_proj"][0]
    x1 = x + o
    xn2 = ln(x1, p["n2_g"][0], p["n2_b"][0])
    h = xn2 @ p["w_fc1"] + p["b_fc1"][0]
    h = 0.5 * h * (1.0 + jax.lax.erf(h / jnp.sqrt(2.0)))
    h = h @ p["w_fc2"] + p["b_fc2"][0]
    return x1 + h


def init_params(key):
    ks = jax.random.split(key, 8)
    s = 0.02
    return {
        "n1_g": jnp.ones((1, DIM), jnp.float32) + 0.1 * jax.random.normal(ks[0], (1, DIM)),
        "n1_b": 0.1 * jax.random.normal(ks[1], (1, DIM)),
        "w_qkv": s * jax.random.normal(ks[2], (DIM, 3 * DIM)),       # (in, out) — pre-transposed
        "w_proj": s * jax.random.normal(ks[3], (DIM, DIM)),
        "b_proj": s * jax.random.normal(ks[4], (1, DIM)),
        "n2_g": jnp.ones((1, DIM), jnp.float32) + 0.1 * jax.random.normal(ks[5], (1, DIM)),
        "n2_b": 0.1 * jax.random.normal(ks[6], (1, DIM)),
        "w_fc1": s * jax.random.normal(ks[7], (DIM, MLP_HIDDEN)),
        "b_fc1": jnp.linspace(-0.01, 0.01, MLP_HIDDEN, dtype=jnp.float32).reshape(1, MLP_HIDDEN),
        "w_fc2": s * jax.random.normal(jax.random.PRNGKey(123), (MLP_HIDDEN, DIM)),
        "b_fc2": jnp.linspace(-0.01, 0.01, DIM, dtype=jnp.float32).reshape(1, DIM),
    }


if __name__ == "__main__":
    key = jax.random.PRNGKey(0)
    kx, kp = jax.random.split(key)
    x = jax.random.normal(kx, (B, N, DIM), jnp.float32)
    params = init_params(kp)

    out = gated_block(x, params, temp=1.0)
    out = jax.block_until_ready(out)

    ref = gated_block_ref(x, params, temp=1.0)
    assert out.shape == (B, N, DIM)
    # Tolerance is 5e-4 (not 1e-4) because the softmax denominator uses the
    # approximate EUP reciprocal; error contribution at these scales is ~1e-5.
    assert jnp.allclose(out, ref, atol=5e-4, rtol=5e-4), (
        f"max abs err {jnp.max(jnp.abs(out - ref))}"
    )
    print("KERNEL_OK")
</pallas_src>

<mosaic_0001>
module attributes {stable_mosaic.version = 11 : i64} {
  func.func @gated_block_kernel(%arg0: i32, %arg1: memref<1x1xf32, #tpu.memory_space<smem>>, %arg2: memref<1x8x32xf32, #tpu.memory_space<vmem>>, %arg3: memref<32x96xf32, #tpu.memory_space<vmem>>, %arg4: memref<1x96xf32, #tpu.memory_space<vmem>>, %arg5: memref<32x32xf32, #tpu.memory_space<vmem>>, %arg6: memref<1x32xf32, #tpu.memory_space<vmem>>, %arg7: memref<32x128xf32, #tpu.memory_space<vmem>>, %arg8: memref<1x128xf32, #tpu.memory_space<vmem>>, %arg9: memref<128x32xf32, #tpu.memory_space<vmem>>, %arg10: memref<1x32xf32, #tpu.memory_space<vmem>>, %arg11: memref<1x8x32xf32, #tpu.memory_space<vmem>>) attributes {dimension_semantics = [#tpu.dimension_semantics<parallel>], iteration_bounds = array<i64: 2>, scalar_prefetch = 0 : i64, scratch_operands = 0 : i64, tpu.core_type = #tpu.core_type<tc>, window_params = [{transform_indices = @transform_0, window_bounds = array<i64: 1, 1>}, {transform_indices = @transform_1, window_bounds = array<i64: 1, 8, 32>}, {pipeline_mode = #tpu.pipeline_mode<synchronous>, transform_indices = @transform_2, window_bounds = array<i64: 32, 96>}, {pipeline_mode = #tpu.pipeline_mode<synchronous>, transform_indices = @transform_3, window_bounds = array<i64: 1, 96>}, {pipeline_mode = #tpu.pipeline_mode<synchronous>, transform_indices = @transform_4, window_bounds = array<i64: 32, 32>}, {pipeline_mode = #tpu.pipeline_mode<synchronous>, transform_indices = @transform_5, window_bounds = array<i64: 1, 32>}, {pipeline_mode = #tpu.pipeline_mode<synchronous>, transform_indices = @transform_6, window_bounds = array<i64: 32, 128>}, {pipeline_mode = #tpu.pipeline_mode<synchronous>, transform_indices = @transform_7, window_bounds = array<i64: 1, 128>}, {pipeline_mode = #tpu.pipeline_mode<synchronous>, transform_indices = @transform_8, window_bounds = array<i64: 128, 32>}, {pipeline_mode = #tpu.pipeline_mode<synchronous>, transform_indices = @transform_9, window_bounds = array<i64: 1, 32>}, {transform_indices = @transform_10, window_bounds = array<i64: 1, 8, 32>}]} {
    %c0 = arith.constant 0 : index
    %c0_0 = arith.constant 0 : index
    %c0_1 = arith.constant 0 : index
    %0 = vector.load %arg2[%c0, %c0_0, %c0_1] : memref<1x8x32xf32, #tpu.memory_space<vmem>>, vector<1x8x32xf32>
    %1 = vector.shape_cast %0 : vector<1x8x32xf32> to vector<8x32xf32>
    %c0_2 = arith.constant 0 : index
    %c0_3 = arith.constant 0 : index
    %2 = memref.load %arg1[%c0_2, %c0_3] : memref<1x1xf32, #tpu.memory_space<smem>>
    %cst = arith.constant dense<0.000000e+00> : vector<8xf32>
    %3 = vector.multi_reduction <add>, %1, %cst [1] : vector<8x32xf32> to vector<8xf32>
    %4 = vector.shape_cast %3 : vector<8xf32> to vector<8x1xf32>
    %cst_4 = arith.constant 3.200000e+01 : f32
    %5 = vector.broadcast %cst_4 : f32 to vector<8x1xf32>
    %6 = arith.divf %4, %5 : vector<8x1xf32>
    %7 = vector.broadcast %6 : vector<8x1xf32> to vector<8x32xf32>
    %8 = arith.subf %1, %7 : vector<8x32xf32>
    %9 = arith.mulf %8, %8 : vector<8x32xf32>
    %cst_5 = arith.constant dense<0.000000e+00> : vector<8xf32>
    %10 = vector.multi_reduction <add>, %9, %cst_5 [1] : vector<8x32xf32> to vector<8xf32>
    %11 = vector.shape_cast %10 : vector<8xf32> to vector<8x1xf32>
    %cst_6 = arith.constant 3.200000e+01 : f32
    %12 = vector.broadcast %cst_6 : f32 to vector<8x1xf32>
    %13 = arith.divf %11, %12 : vector<8x1xf32>
    %14 = vector.broadcast %6 : vector<8x1xf32> to vector<8x32xf32>
    %15 = arith.subf %1, %14 : vector<8x32xf32>
    %cst_7 = arith.constant 9.99999974E-6 : f32
    %16 = vector.broadcast %cst_7 : f32 to vector<8x1xf32>
    %17 = arith.addf %13, %16 : vector<8x1xf32>
    %18 = math.rsqrt %17 : vector<8x1xf32>
    %19 = vector.broadcast %18 : vector<8x1xf32> to vector<8x32xf32>
    %20 = arith.mulf %15, %19 : vector<8x32xf32>
    %c0_8 = arith.constant 0 : index
    %c0_9 = arith.constant 0 : index
    %21 = vector.load %arg3[%c0_8, %c0_9] : memref<32x96xf32, #tpu.memory_space<vmem>>, vector<32x96xf32>
    %cst_10 = arith.constant dense<0.000000e+00> : vector<8x96xf32>
    %22 = tpu.matmul %20, %21, %cst_10 {dimension_numbers = #tpu.dot_dimension_numbers<[1], [0], [0], [1], [0, 0, 1, 1], [], []>} : vector<8x32xf32>, vector<32x96xf32>, vector<8x96xf32> -> vector<8x96xf32>
    %c0_11 = arith.constant 0 : index
    %c0_12 = arith.constant 0 : index
    %23 = vector.load %arg4[%c0_11, %c0_12] : memref<1x96xf32, #tpu.memory_space<vmem>>, vector<1x96xf32>
    %24 = vector.broadcast %23 : vector<1x96xf32> to vector<8x96xf32>
    %25 = arith.addf %22, %24 : vector<8x96xf32>
    %26 = vector.shape_cast %25 : vector<8x96xf32> to vector<8x12x8xf32>
    %27 = tpu.transpose %26, [1, 0, 2] : vector<8x12x8xf32> -> vector<12x8x8xf32>
    %28 = vector.extract_strided_slice %27 {offsets = [0, 0, 0], sizes = [4, 8, 8], strides = [1, 1, 1]} : vector<12x8x8xf32> to vector<4x8x8xf32>
    %29 = vector.extract_strided_slice %27 {offsets = [4, 0, 0], sizes = [4, 8, 8], strides = [1, 1, 1]} : vector<12x8x8xf32> to vector<4x8x8xf32>
    %30 = vector.extract_strided_slice %27 {offsets = [8, 0, 0], sizes = [4, 8, 8], strides = [1, 1, 1]} : vector<12x8x8xf32> to vector<4x8x8xf32>
    "tpu.trace_start"() <{level = 10 : i32, message = "hqd,hkd->hqk"}> : () -> ()
    %cst_13 = arith.constant dense<0.000000e+00> : vector<4x8x8xf32>
    %31 = tpu.matmul %28, %29, %cst_13 {dimension_numbers = #tpu.dot_dimension_numbers<[2], [2], [1], [1], [0, 0, 0, 1, 1, 1], [0], [0]>} : vector<4x8x8xf32>, vector<4x8x8xf32>, vector<4x8x8xf32> -> vector<4x8x8xf32>
    "tpu.trace_stop"() : () -> ()
    %32 = vector.broadcast %2 : f32 to vector<4x8x8xf32>
    %33 = arith.mulf %31, %32 : vector<4x8x8xf32>
    %cst_14 = arith.constant dense<0xFF800000> : vector<4x8xf32>
    %34 = vector.multi_reduction <maximumf>, %33, %cst_14 [2] : vector<4x8x8xf32> to vector<4x8xf32>
    %35 = vector.shape_cast %34 : vector<4x8xf32> to vector<4x8x1xf32>
    %36 = vector.broadcast %35 : vector<4x8x1xf32> to vector<4x8x8xf32>
    %37 = arith.subf %33, %36 : vector<4x8x8xf32>
    %38 = math.exp %37 : vector<4x8x8xf32>
    %cst_15 = arith.constant dense<0.000000e+00> : vector<4x8xf32>
    %39 = vector.multi_reduction <add>, %38, %cst_15 [2] : vector<4x8x8xf32> to vector<4x8xf32>
    %40 = vector.shape_cast %39 : vector<4x8xf32> to vector<4x8x1xf32>
    %41 = tpu.reciprocal %40 {approx = true} : vector<4x8x1xf32> -> vector<4x8x1xf32>
    %42 = vector.broadcast %41 : vector<4x8x1xf32> to vector<4x8x8xf32>
    %43 = arith.mulf %38, %42 : vector<4x8x8xf32>
    "tpu.trace_start"() <{level = 10 : i32, message = "hqk,hkd->hqd"}> : () -> ()
    %cst_16 = arith.constant dense<0.000000e+00> : vector<4x8x8xf32>
    %44 = tpu.matmul %43, %30, %cst_16 {dimension_numbers = #tpu.dot_dimension_numbers<[2], [1], [1], [2], [0, 0, 0, 1, 1, 2], [0], [0]>} : vector<4x8x8xf32>, vector<4x8x8xf32>, vector<4x8x8xf32> -> vector<4x8x8xf32>
    "tpu.trace_stop"() : () -> ()
    %45 = tpu.transpose %44, [1, 0, 2] : vector<4x8x8xf32> -> vector<8x4x8xf32>
    %46 = vector.shape_cast %45 : vector<8x4x8xf32> to vector<8x32xf32>
    %c0_17 = arith.constant 0 : index
    %c0_18 = arith.constant 0 : index
    %47 = vector.load %arg5[%c0_17, %c0_18] : memref<32x32xf32, #tpu.memory_space<vmem>>, vector<32x32xf32>
    %cst_19 = arith.constant dense<0.000000e+00> : vector<8x32xf32>
    %48 = tpu.matmul %46, %47, %cst_19 {dimension_numbers = #tpu.dot_dimension_numbers<[1], [0], [0], [1], [0, 0, 1, 1], [], []>} : vector<8x32xf32>, vector<32x32xf32>, vector<8x32xf32> -> vector<8x32xf32>
    %c0_20 = arith.constant 0 : index
    %c0_21 = arith.constant 0 : index
    %49 = vector.load %arg6[%c0_20, %c0_21] : memref<1x32xf32, #tpu.memory_space<vmem>>, vector<1x32xf32>
    %50 = vector.broadcast %49 : vector<1x32xf32> to vector<8x32xf32>
    %51 = arith.addf %48, %50 : vector<8x32xf32>
    %52 = arith.addf %1, %51 : vector<8x32xf32>
    %cst_22 = arith.constant dense<0.000000e+00> : vector<8xf32>
    %53 = vector.multi_reduction <add>, %52, %cst_22 [1] : vector<8x32xf32> to vector<8xf32>
    %54 = vector.shape_cast %53 : vector<8xf32> to vector<8x1xf32>
    %cst_23 = arith.constant 3.200000e+01 : f32
    %55 = vector.broadcast %cst_23 : f32 to vector<8x1xf32>
    %56 = arith.divf %54, %55 : vector<8x1xf32>
    %57 = vector.broadcast %56 : vector<8x1xf32> to vector<8x32xf32>
    %58 = arith.subf %52, %57 : vector<8x32xf32>
    %59 = arith.mulf %58, %58 : vector<8x32xf32>
    %cst_24 = arith.constant dense<0.000000e+00> : vector<8xf32>
    %60 = vector.multi_reduction <add>, %59, %cst_24 [1] : vector<8x32xf32> to vector<8xf32>
    %61 = vector.shape_cast %60 : vector<8xf32> to vector<8x1xf32>
    %cst_25 = arith.constant 3.200000e+01 : f32
    %62 = vector.broadcast %cst_25 : f32 to vector<8x1xf32>
    %63 = arith.divf %61, %62 : vector<8x1xf32>
    %64 = vector.broadcast %56 : vector<8x1xf32> to vector<8x32xf32>
    %65 = arith.subf %52, %64 : vector<8x32xf32>
    %cst_26 = arith.constant 9.99999974E-6 : f32
    %66 = vector.broadcast %cst_26 : f32 to vector<8x1xf32>
    %67 = arith.addf %63, %66 : vector<8x1xf32>
    %68 = math.rsqrt %67 : vector<8x1xf32>
    %69 = vector.broadcast %68 : vector<8x1xf32> to vector<8x32xf32>
    %70 = arith.mulf %65, %69 : vector<8x32xf32>
    %c0_27 = arith.constant 0 : index
    %c0_28 = arith.constant 0 : index
    %71 = vector.load %arg7[%c0_27, %c0_28] : memref<32x128xf32, #tpu.memory_space<vmem>>, vector<32x128xf32>
    %cst_29 = arith.constant dense<0.000000e+00> : vector<8x128xf32>
    %72 = tpu.matmul %70, %71, %cst_29 {dimension_numbers = #tpu.dot_dimension_numbers<[1], [0], [0], [1], [0, 0, 1, 1], [], []>} : vector<8x32xf32>, vector<32x128xf32>, vector<8x128xf32> -> vector<8x128xf32>
    %c0_30 = arith.constant 0 : index
    %c0_31 = arith.constant 0 : index
    %73 = vector.load %arg8[%c0_30, %c0_31] : memref<1x128xf32, #tpu.memory_space<vmem>>, vector<1x128xf32>
    %74 = vector.broadcast %73 : vector<1x128xf32> to vector<8x128xf32>
    %75 = arith.addf %72, %74 : vector<8x128xf32>
    %cst_32 = arith.constant 5.000000e-01 : f32
    %76 = vector.broadcast %cst_32 : f32 to vector<8x128xf32>
    %77 = arith.mulf %76, %75 : vector<8x128xf32>
    %cst_33 = arith.constant 2.000000e+00 : f32
    %78 = math.sqrt %cst_33 : f32
    %79 = vector.broadcast %78 : f32 to vector<8x128xf32>
    %80 = arith.divf %75, %79 : vector<8x128xf32>
    %81 = math.erf %80 : vector<8x128xf32>
    %cst_34 = arith.constant 1.000000e+00 : f32
    %82 = vector.broadcast %cst_34 : f32 to vector<8x128xf32>
    %83 = arith.addf %82, %81 : vector<8x128xf32>
    %84 = arith.mulf %77, %83 : vector<8x128xf32>
    %c0_35 = arith.constant 0 : index
    %c0_36 = arith.constant 0 : index
    %85 = vector.load %arg9[%c0_35, %c0_36] : memref<128x32xf32, #tpu.memory_space<vmem>>, vector<128x32xf32>
    %cst_37 = arith.constant dense<0.000000e+00> : vector<8x32xf32>
    %86 = tpu.matmul %84, %85, %cst_37 {dimension_numbers = #tpu.dot_dimension_numbers<[1], [0], [0], [1], [0, 0, 1, 1], [], []>} : vector<8x128xf32>, vector<128x32xf32>, vector<8x32xf32> -> vector<8x32xf32>
    %c0_38 = arith.constant 0 : index
    %c0_39 = arith.constant 0 : index
    %87 = vector.load %arg10[%c0_38, %c0_39] : memref<1x32xf32, #tpu.memory_space<vmem>>, vector<1x32xf32>
    %88 = vector.broadcast %87 : vector<1x32xf32> to vector<8x32xf32>
    %89 = arith.addf %86, %88 : vector<8x32xf32>
    %90 = arith.addf %52, %89 : vector<8x32xf32>
    %c0_40 = arith.constant 0 : index
    %c0_41 = arith.constant 0 : index
    %c0_42 = arith.constant 0 : index
    %91 = vector.load %arg11[%c0_40, %c0_41, %c0_42] : memref<1x8x32xf32, #tpu.memory_space<vmem>>, vector<1x8x32xf32>
    %92 = vector.shape_cast %91 : vector<1x8x32xf32> to vector<8x32xf32>
    %93 = vector.shape_cast %90 : vector<8x32xf32> to vector<1x8x32xf32>
    tpu.vector_store %arg11[%c0_40, %c0_41, %c0_42], %93 {strides = array<i32>} : memref<1x8x32xf32, #tpu.memory_space<vmem>>, vector<1x8x32xf32>,
    return
  }
  func.func @transform_0(%arg0: i32) -> (i32, i32) {
    %c0_i32 = arith.constant 0 : i32
    %c0_i32_0 = arith.constant 0 : i32
    %c0_i32_1 = arith.constant 0 : i32
    return %c0_i32, %c0_i32_0 : i32, i32
  }
  func.func @transform_1(%arg0: i32) -> (i32, i32, i32) {
    %c0_i32 = arith.constant 0 : i32
    %c0_i32_0 = arith.constant 0 : i32
    %c0_i32_1 = arith.constant 0 : i32
    return %arg0, %c0_i32, %c0_i32_0 : i32, i32, i32
  }
  func.func @transform_2(%arg0: i32) -> (i32, i32) {
    %c0_i32 = arith.constant 0 : i32
    %c0_i32_0 = arith.constant 0 : i32
    %c0_i32_1 = arith.constant 0 : i32
    return %c0_i32, %c0_i32_0 : i32, i32
  }
  func.func @transform_3(%arg0: i32) -> (i32, i32) {
    %c0_i32 = arith.constant 0 : i32
    %c0_i32_0 = arith.constant 0 : i32
    %c0_i32_1 = arith.constant 0 : i32
    return %c0_i32, %c0_i32_0 : i32, i32
  }
  func.func @transform_4(%arg0: i32) -> (i32, i32) {
    %c0_i32 = arith.constant 0 : i32
    %c0_i32_0 = arith.constant 0 : i32
    %c0_i32_1 = arith.constant 0 : i32
    return %c0_i32, %c0_i32_0 : i32, i32
  }
  func.func @transform_5(%arg0: i32) -> (i32, i32) {
    %c0_i32 = arith.constant 0 : i32
    %c0_i32_0 = arith.constant 0 : i32
    %c0_i32_1 = arith.constant 0 : i32
    return %c0_i32, %c0_i32_0 : i32, i32
  }
  func.func @transform_6(%arg0: i32) -> (i32, i32) {
    %c0_i32 = arith.constant 0 : i32
    %c0_i32_0 = arith.constant 0 : i32
    %c0_i32_1 = arith.constant 0 : i32
    return %c0_i32, %c0_i32_0 : i32, i32
  }
  func.func @transform_7(%arg0: i32) -> (i32, i32) {
    %c0_i32 = arith.constant 0 : i32
    %c0_i32_0 = arith.constant 0 : i32
    %c0_i32_1 = arith.constant 0 : i32
    return %c0_i32, %c0_i32_0 : i32, i32
  }
  func.func @transform_8(%arg0: i32) -> (i32, i32) {
    %c0_i32 = arith.constant 0 : i32
    %c0_i32_0 = arith.constant 0 : i32
    %c0_i32_1 = arith.constant 0 : i32
    return %c0_i32, %c0_i32_0 : i32, i32
  }
  func.func @transform_9(%arg0: i32) -> (i32, i32) {
    %c0_i32 = arith.constant 0 : i32
    %c0_i32_0 = arith.constant 0 : i32
    %c0_i32_1 = arith.constant 0 : i32
    return %c0_i32, %c0_i32_0 : i32, i32
  }
  func.func @transform_10(%arg0: i32) -> (i32, i32, i32) {
    %c0_i32 = arith.constant 0 : i32
    %c0_i32_0 = arith.constant 0 : i32
    %c0_i32_1 = arith.constant 0 : i32
    return %arg0, %c0_i32, %c0_i32_0 : i32, i32, i32
  }
}

</mosaic_0001>

<llo_original>
// kernel: tpu_custom_call.1
$region0: #{tpu_custom_call.1}
  #allocation0 [shape = 'u32[]', space=smem, size = 0x4, offset = 0x4, fixed_abs, tag = 'smem constant byte address 0x4 - core index']
  #allocation1 [shape = 'u32[144,128]{1,0:T(1,128)}', space=vmem, size = 0x12000, scoped, tag = 'internal scratch']
  #allocation2 [shape = 'f32[1,1]{1,0:T(1,128)S(6)}', space=smem, size = 0x200, scoped, tag = 'scoped memory for tpu_custom_call.1']
  %s0 = inlined_call_operand.<no memory space> [shape: f32[1,1], index: 0, kind: input, shape index: {}]
  %s1 = inlined_call_operand.vmem [shape: f32[2,8,32], index: 1, kind: input, shape index: {}]
  %s2 = inlined_call_operand.vmem [shape: f32[32,96], index: 2, kind: input, shape index: {}]
  %s3 = inlined_call_operand.vmem [shape: f32[1,96], index: 3, kind: input, shape index: {}]
  %s4 = inlined_call_operand.vmem [shape: f32[32,32], index: 4, kind: input, shape index: {}]
  %s5 = inlined_call_operand.vmem [shape: f32[1,32], index: 5, kind: input, shape index: {}]
  %s6 = inlined_call_operand.vmem [shape: f32[32,128], index: 6, kind: input, shape index: {}]
  %s7 = inlined_call_operand.vmem [shape: f32[1,128], index: 7, kind: input, shape index: {}]
  %s8 = inlined_call_operand.vmem [shape: f32[128,32], index: 8, kind: input, shape index: {}]
  %s9 = inlined_call_operand.vmem [shape: f32[1,32], index: 9, kind: input, shape index: {}]
  %s10 = inlined_call_operand.hbm [shape: f32[2,8,32], index: 10, kind: output, shape index: {}]
  %s11 = sld [smem:[#allocation0]]
  $region73: #{tpu_custom_call.1} parent=0
    _
  %s13 = ssub.s32 1, %s11
  %s14 = scalar_select 0, %s13, %s11
  %15 = sst [smem:[#allocation2]] %s0
  $region1: #{tpu_custom_call.1} parent=0
    #allocation3 [shape = 'u8[8192]{0}', space=vmem, size = 0x2000, scoped, tag = 'output window, operand 0']
    #allocation4 [shape = 's32[2]{0}', space=sflag, size = 0x8, scoped, tag = 'scoped memory for tpu_custom_call.1']
    %16 = vsyncpa [#allocation4], 0
    %s17 = scalar_lea.sflag [#allocation4], 1
    %18 = vsyncpa %s17, 0
    loop: start=0, step=1, limit=4
    $region2: #{tpu_custom_call.1} parent=1 // loop_pre_header
      _
    $region3: #{tpu_custom_call.1} parent=1 // loop_header
      %s20 = sphi 0, %s24
      %p21 = scmp.ge.s32.totalorder %s20, 4
      %s28 = sphi 0, %s28
      %s30 = sphi 0, %s28
      %s31 = sphi 0, %s30
      %s45 = sphi 0, %s31
      %s51 = sphi 0, %s53
      %s54 = sphi 0, %s51
      %s55 = sphi 0, %s54
      %s71 = sphi 0, %s55
      %s75 = sphi 0, %s75
      %s77 = sphi 0, %s75
      %s78 = sphi 0, %s77
      %s92 = sphi 0, %s78
      %s96 = sphi 0, %s96
      %s98 = sphi 0, %s96
      %s99 = sphi 0, %s98
      %s113 = sphi 0, %s99
      %s117 = sphi 0, %s117
      %s119 = sphi 0, %s117
      %s120 = sphi 0, %s119
      %s134 = sphi 0, %s120
      %s138 = sphi 0, %s138
      %s140 = sphi 0, %s138
      %s141 = sphi 0, %s140
      %s155 = sphi 0, %s141
      %s159 = sphi 0, %s159
      %s161 = sphi 0, %s159
      %s162 = sphi 0, %s161
      %s176 = sphi 0, %s162
      %s180 = sphi 0, %s180
      %s182 = sphi 0, %s180
      %s183 = sphi 0, %s182
      %s197 = sphi 0, %s183
      %s201 = sphi 0, %s201
      %s203 = sphi 0, %s201
      %s204 = sphi 0, %s203
      %s218 = sphi 0, %s204
      %s222 = sphi 0, %s222
      %s224 = sphi 0, %s222
      %s225 = sphi 0, %s224
      %s239 = sphi 0, %s225
      %s245 = sphi 0, %s247
      %s248 = sphi 0, %s245
      %s249 = sphi 0, %s248
      %s265 = sphi 0, %s249
    $region4: #{tpu_custom_call.1} parent=1 // loop_header_branch
      %23 = sbr.rel (%p21) target = $region8
    $region5: #{tpu_custom_call.1} parent=1 // loop_body
      %s25 = ssub.s32 %s20, 1
      %s26 = ssub.s32 %s20, 2
      %s27 = sadd.s32 %s20, 1
      %s29 = sadd.s32 %s28, 1
      %p32 = scmp.eq.s32.totalorder %s20, 1
      %p33 = scmp.ne.s32.totalorder %s28, %s30
      %p34 = scmp.eq.s32.totalorder %s20, 0
      %p35 = por %p33, %p34
      %p36 = scmp.ne.s32.totalorder %s28, %s30
      %p37 = scmp.eq.s32.totalorder %s25, 1
      %p38 = por %p36, %p37
      %p39 = scmp.ne.s32.totalorder %s30, %s31
      %p40 = scmp.eq.s32.totalorder %s25, 0
      %p41 = por %p39, %p40
      %p42 = scmp.ne.s32.totalorder %s30, %s31
      %p43 = scmp.eq.s32.totalorder %s26, 1
      %p44 = por %p42, %p43
      %p46 = scmp.ne.s32.totalorder %s31, %s45
      %p47 = scmp.eq.s32.totalorder %s26, 0
      %p48 = por %p46, %p47
      %s49 = ssub.s32 %s20, %s27
      %p50 = scmp.eq.s32.totalorder %s49, 0
      %s52 = sadd.s32 %s51, 1
      %s53 = scalar_select %p50, %s51, %s52
      %p56 = pneg %p50
      %p57 = scmp.eq.s32.totalorder %s20, 1
      %p58 = por %p56, %p57
      %p59 = scmp.ne.s32.totalorder %s51, %s54
      %p60 = scmp.eq.s32.totalorder %s20, 0
      %p61 = por %p59, %p60
      %p62 = scmp.ne.s32.totalorder %s51, %s54
      %p63 = scmp.eq.s32.totalorder %s25, 1
      %p64 = por %p62, %p63
      %p65 = scmp.ne.s32.totalorder %s54, %s55
      %p66 = scmp.eq.s32.totalorder %s25, 0
      %p67 = por %p65, %p66
      %p68 = scmp.ne.s32.totalorder %s54, %s55
      %p69 = scmp.eq.s32.totalorder %s26, 1
      %p70 = por %p68, %p69
      %p72 = scmp.ne.s32.totalorder %s55, %s71
      %p73 = scmp.eq.s32.totalorder %s26, 0
      %p74 = por %p72, %p73
      %s76 = sadd.s32 %s75, 1
      %p79 = scmp.eq.s32.totalorder %s20, 1
      %p80 = scmp.ne.s32.totalorder %s75, %s77
      %p81 = scmp.eq.s32.totalorder %s20, 0
      %p82 = por %p80, %p81
      %p83 = scmp.ne.s32.totalorder %s75, %s77
      %p84 = scmp.eq.s32.totalorder %s25, 1
      %p85 = por %p83, %p84
      %p86 = scmp.ne.s32.totalorder %s77, %s78
      %p87 = scmp.eq.s32.totalorder %s25, 0
      %p88 = por %p86, %p87
      %p89 = scmp.ne.s32.totalorder %s77, %s78
      %p90 = scmp.eq.s32.totalorder %s26, 1
      %p91 = por %p89, %p90
      %p93 = scmp.ne.s32.totalorder %s78, %s92
      %p94 = scmp.eq.s32.totalorder %s26, 0
      %p95 = por %p93, %p94
      %s97 = sadd.s32 %s96, 1
      %p100 = scmp.eq.s32.totalorder %s20, 1
      %p101 = scmp.ne.s32.totalorder %s96, %s98
      %p102 = scmp.eq.s32.totalorder %s20, 0
      %p103 = por %p101, %p102
      %p104 = scmp.ne.s32.totalorder %s96, %s98
      %p105 = scmp.eq.s32.totalorder %s25, 1
      %p106 = por %p104, %p105
      %p107 = scmp.ne.s32.totalorder %s98, %s99
      %p108 = scmp.eq.s32.totalorder %s25, 0
      %p109 = por %p107, %p108
      %p110 = scmp.ne.s32.totalorder %s98, %s99
      %p111 = scmp.eq.s32.totalorder %s26, 1
      %p112 = por %p110, %p111
      %p114 = scmp.ne.s32.totalorder %s99, %s113
      %p115 = scmp.eq.s32.totalorder %s26, 0
      %p116 = por %p114, %p115
      %s118 = sadd.s32 %s117, 1
      %p121 = scmp.eq.s32.totalorder %s20, 1
      %p122 = scmp.ne.s32.totalorder %s117, %s119
      %p123 = scmp.eq.s32.totalorder %s20, 0
      %p124 = por %p122, %p123
      %p125 = scmp.ne.s32.totalorder %s117, %s119
      %p126 = scmp.eq.s32.totalorder %s25, 1
      %p127 = por %p125, %p126
      %p128 = scmp.ne.s32.totalorder %s119, %s120
      %p129 = scmp.eq.s32.totalorder %s25, 0
      %p130 = por %p128, %p129
      %p131 = scmp.ne.s32.totalorder %s119, %s120
      %p132 = scmp.eq.s32.totalorder %s26, 1
      %p133 = por %p131, %p132
      %p135 = scmp.ne.s32.totalorder %s120, %s134
      %p136 = scmp.eq.s32.totalorder %s26, 0
      %p137 = por %p135, %p136
      %s139 = sadd.s32 %s138, 1
      %p142 = scmp.eq.s32.totalorder %s20, 1
      %p143 = scmp.ne.s32.totalorder %s138, %s140
      %p144 = scmp.eq.s32.totalorder %s20, 0
      %p145 = por %p143, %p144
      %p146 = scmp.ne.s32.totalorder %s138, %s140
      %p147 = scmp.eq.s32.totalorder %s25, 1
      %p148 = por %p146, %p147
      %p149 = scmp.ne.s32.totalorder %s140, %s141
      %p150 = scmp.eq.s32.totalorder %s25, 0
      %p151 = por %p149, %p150
      %p152 = scmp.ne.s32.totalorder %s140, %s141
      %p153 = scmp.eq.s32.totalorder %s26, 1
      %p154 = por %p152, %p153
      %p156 = scmp.ne.s32.totalorder %s141, %s155
      %p157 = scmp.eq.s32.totalorder %s26, 0
      %p158 = por %p156, %p157
      %s160 = sadd.s32 %s159, 1
      %p163 = scmp.eq.s32.totalorder %s20, 1
      %p164 = scmp.ne.s32.totalorder %s159, %s161
      %p165 = scmp.eq.s32.totalorder %s20, 0
      %p166 = por %p164, %p165
      %p167 = scmp.ne.s32.totalorder %s159, %s161
      %p168 = scmp.eq.s32.totalorder %s25, 1
      %p169 = por %p167, %p168
      %p170 = scmp.ne.s32.totalorder %s161, %s162
      %p171 = scmp.eq.s32.totalorder %s25, 0
      %p172 = por %p170, %p171
      %p173 = scmp.ne.s32.totalorder %s161, %s162
      %p174 = scmp.eq.s32.totalorder %s26, 1
      %p175 = por %p173, %p174
      %p177 = scmp.ne.s32.totalorder %s162, %s176
      %p178 = scmp.eq.s32.totalorder %s26, 0
      %p179 = por %p177, %p178
      %s181 = sadd.s32 %s180, 1
      %p184 = scmp.eq.s32.totalorder %s20, 1
      %p185 = scmp.ne.s32.totalorder %s180, %s182
      %p186 = scmp.eq.s32.totalorder %s20, 0
      %p187 = por %p185, %p186
      %p188 = scmp.ne.s32.totalorder %s180, %s182
      %p189 = scmp.eq.s32.totalorder %s25, 1
      %p190 = por %p188, %p189
      %p191 = scmp.ne.s32.totalorder %s182, %s183
      %p192 = scmp.eq.s32.totalorder %s25, 0
      %p193 = por %p191, %p192
      %p194 = scmp.ne.s32.totalorder %s182, %s183
      %p195 = scmp.eq.s32.totalorder %s26, 1
      %p196 = por %p194, %p195
      %p198 = scmp.ne.s32.totalorder %s183, %s197
      %p199 = scmp.eq.s32.totalorder %s26, 0
      %p200 = por %p198, %p199
      %s202 = sadd.s32 %s201, 1
      %p205 = scmp.eq.s32.totalorder %s20, 1
      %p206 = scmp.ne.s32.totalorder %s201, %s203
      %p207 = scmp.eq.s32.totalorder %s20, 0
      %p208 = por %p206, %p207
      %p209 = scmp.ne.s32.totalorder %s201, %s203
      %p210 = scmp.eq.s32.totalorder %s25, 1
      %p211 = por %p209, %p210
      %p212 = scmp.ne.s32.totalorder %s203, %s204
      %p213 = scmp.eq.s32.totalorder %s25, 0
      %p214 = por %p212, %p213
      %p215 = scmp.ne.s32.totalorder %s203, %s204
      %p216 = scmp.eq.s32.totalorder %s26, 1
      %p217 = por %p215, %p216
      %p219 = scmp.ne.s32.totalorder %s204, %s218
      %p220 = scmp.eq.s32.totalorder %s26, 0
      %p221 = por %p219, %p220
      %s223 = sadd.s32 %s222, 1
      %p226 = scmp.eq.s32.totalorder %s20, 1
      %p227 = scmp.ne.s32.totalorder %s222, %s224
      %p228 = scmp.eq.s32.totalorder %s20, 0
      %p229 = por %p227, %p228
      %p230 = scmp.ne.s32.totalorder %s222, %s224
      %p231 = scmp.eq.s32.totalorder %s25, 1
      %p232 = por %p230, %p231
      %p233 = scmp.ne.s32.totalorder %s224, %s225
      %p234 = scmp.eq.s32.totalorder %s25, 0
      %p235 = por %p233, %p234
      %p236 = scmp.ne.s32.totalorder %s224, %s225
      %p237 = scmp.eq.s32.totalorder %s26, 1
      %p238 = por %p236, %p237
      %p240 = scmp.ne.s32.totalorder %s225, %s239
      %p241 = scmp.eq.s32.totalorder %s26, 0
      %p242 = por %p240, %p241
      %s243 = ssub.s32 %s20, %s27
      %p244 = scmp.eq.s32.totalorder %s243, 0
      %s246 = sadd.s32 %s245, 1
      %s247 = scalar_select %p244, %s245, %s246
      %p250 = pneg %p244
      %p251 = scmp.eq.s32.totalorder %s20, 1
      %p252 = por %p250, %p251
      %p253 = scmp.ne.s32.totalorder %s245, %s248
      %p254 = scmp.eq.s32.totalorder %s20, 0
      %p255 = por %p253, %p254
      %p256 = scmp.ne.s32.totalorder %s245, %s248
      %p257 = scmp.eq.s32.totalorder %s25, 1
      %p258 = por %p256, %p257
      %p259 = scmp.ne.s32.totalorder %s248, %s249
      %p260 = scmp.eq.s32.totalorder %s25, 0
      %p261 = por %p259, %p260
      %p262 = scmp.ne.s32.totalorder %s248, %s249
      %p263 = scmp.eq.s32.totalorder %s26, 1
      %p264 = por %p262, %p263
      %p266 = scmp.ne.s32.totalorder %s249, %s265
      %p267 = scmp.eq.s32.totalorder %s26, 0
      %p268 = por %p266, %p267
      %p269 = scmp.le.s32.totalorder 1, %s20
      %p270 = scmp.lt.s32.totalorder %s20, 3
      %p271 = pnand %p269, %p270
      %p272 = pneg %p271
      // Predicated region
      $region9: #{tpu_custom_call.1} parent=5 // pred_check
        _
      $region10: #{tpu_custom_call.1} parent=5 // pred_check_branch
        %274 = sbr.rel (%p271) target = $region12
      $region11: #{tpu_custom_call.1} parent=5 // pred_region
        %s275 = ssub.s32 %s20, 1
        // Predicated region
        $region13: #{tpu_custom_call.1} parent=11 // pred_check
          %p276 = pneg %p41
        $region14: #{tpu_custom_call.1} parent=11 // pred_check_branch
          %278 = sbr.rel (%p276) target = $region16
        $region15: #{tpu_custom_call.1} parent=11 // pred_region
          _
        $region16: #{tpu_custom_call.1} parent=11 // pred_fallthru
          _
        // Predicated region
        $region17: #{tpu_custom_call.1} parent=11 // pred_check
          %p279 = pneg %p88
        $region18: #{tpu_custom_call.1} parent=11 // pred_check_branch
          %281 = sbr.rel (%p279) target = $region20
        $region19: #{tpu_custom_call.1} parent=11 // pred_region
          _
        $region20: #{tpu_custom_call.1} parent=11 // pred_fallthru
          _
        // Predicated region
        $region21: #{tpu_custom_call.1} parent=11 // pred_check
          %p282 = pneg %p109
        $region22: #{tpu_custom_call.1} parent=11 // pred_check_branch
          %284 = sbr.rel (%p282) target = $region24
        $region23: #{tpu_custom_call.1} parent=11 // pred_region
          _
        $region24: #{tpu_custom_call.1} parent=11 // pred_fallthru
          _
        // Predicated region
        $region25: #{tpu_custom_call.1} parent=11 // pred_check
          %p285 = pneg %p130
        $region26: #{tpu_custom_call.1} parent=11 // pred_check_branch
          %287 = sbr.rel (%p285) target = $region28
        $region27: #{tpu_custom_call.1} parent=11 // pred_region
          _
        $region28: #{tpu_custom_call.1} parent=11 // pred_fallthru
          _
        // Predicated region
        $region29: #{tpu_custom_call.1} parent=11 // pred_check
          %p288 = pneg %p151
        $region30: #{tpu_custom_call.1} parent=11 // pred_check_branch
          %290 = sbr.rel (%p288) target = $region32
        $region31: #{tpu_custom_call.1} parent=11 // pred_region
          _
        $region32: #{tpu_custom_call.1} parent=11 // pred_fallthru
          _
        // Predicated region
        $region33: #{tpu_custom_call.1} parent=11 // pred_check
          %p291 = pneg %p172
        $region34: #{tpu_custom_call.1} parent=11 // pred_check_branch
          %293 = sbr.rel (%p291) target = $region36
        $region35: #{tpu_custom_call.1} parent=11 // pred_region
          _
        $region36: #{tpu_custom_call.1} parent=11 // pred_fallthru
          _
        // Predicated region
        $region37: #{tpu_custom_call.1} parent=11 // pred_check
          %p294 = pneg %p193
        $region38: #{tpu_custom_call.1} parent=11 // pred_check_branch
          %296 = sbr.rel (%p294) target = $region40
        $region39: #{tpu_custom_call.1} parent=11 // pred_region
          _
        $region40: #{tpu_custom_call.1} parent=11 // pred_fallthru
          _
        // Predicated region
        $region41: #{tpu_custom_call.1} parent=11 // pred_check
          %p297 = pneg %p214
        $region42: #{tpu_custom_call.1} parent=11 // pred_check_branch
          %299 = sbr.rel (%p297) target = $region44
        $region43: #{tpu_custom_call.1} parent=11 // pred_region
          _
        $region44: #{tpu_custom_call.1} parent=11 // pred_fallthru
          _
        // Predicated region
        $region45: #{tpu_custom_call.1} parent=11 // pred_check
          %p300 = pneg %p235
        $region46: #{tpu_custom_call.1} parent=11 // pred_check_branch
          %302 = sbr.rel (%p300) target = $region48
        $region47: #{tpu_custom_call.1} parent=11 // pred_region
          _
        $region48: #{tpu_custom_call.1} parent=11 // pred_fallthru
          _
      $region12: #{tpu_custom_call.1} parent=5 // pred_fallthru
        _
      %p303 = scmp.lt.s32.totalorder %s20, 2
      // Predicated region
      $region49: #{tpu_custom_call.1} parent=5 // pred_check
        %p304 = pneg %p303
      $region50: #{tpu_custom_call.1} parent=5 // pred_check_branch
        %306 = sbr.rel (%p304) target = $region52
      $region51: #{tpu_custom_call.1} parent=5 // pred_region
        // Predicated region
        $region53: #{tpu_custom_call.1} parent=51 // pred_check
          %p307 = pneg %p61
        $region54: #{tpu_custom_call.1} parent=51 // pred_check_branch
          %309 = sbr.rel (%p307) target = $region56
        $region55: #{tpu_custom_call.1} parent=51 // pred_region
          %p310 = scmp.lt.s32.totalorder %s20, 1
          %s311 = scalar_select %p310, %s20, 1
          %s312 = smul.addr %s311, 8
          %s313 = scalar_lea.vmem %s1, %s312
        $region56: #{tpu_custom_call.1} parent=51 // pred_fallthru
          _
      $region52: #{tpu_custom_call.1} parent=5 // pred_fallthru
        _
      %p314 = scmp.le.s32.totalorder 1, %s20
      %p315 = scmp.lt.s32.totalorder %s20, 3
      %p316 = pnand %p314, %p315
      %p317 = pneg %p316
      // Predicated region
      $region57: #{tpu_custom_call.1} parent=5 // pred_check
        _
      $region58: #{tpu_custom_call.1} parent=5 // pred_check_branch
        %319 = sbr.rel (%p316) target = $region60
      $region59: #{tpu_custom_call.1} parent=5 // pred_region
        %s320 = ssub.s32 %s20, 1
        %p321 = pneg %p41
        %p322 = pneg %p38
        %p323 = scmp.lt.s32.totalorder %s25, 1
        %s324 = scalar_select %p323, %s25, 1
        %s325 = smul.addr %s324, 8
        %s326 = scalar_lea.vmem %s1, %s325
        %p327 = pneg %p67
        %p328 = pneg %p64
        %p329 = pneg %p88
        %p330 = pneg %p85
        %p331 = pneg %p109
        %p332 = pneg %p106
        %p333 = pneg %p130
        %p334 = pneg %p127
        %p335 = pneg %p151
        %p336 = pneg %p148
        %p337 = pneg %p172
        %p338 = pneg %p169
        %p339 = pneg %p193
        %p340 = pneg %p190
        %p341 = pneg %p214
        %p342 = pneg %p211
        %p343 = pneg %p235
        %p344 = pneg %p232
        %p345 = pneg %p261
        %p346 = pneg %p258
        %s347 = sand.u32 %s248, 1
        %s348 = scalar_lea.sflag [#allocation4], %s347
        %s349 = sand.u32 %s248, 1
        %s350 = smul.addr %s349, 8
        %s351 = scalar_lea.vmem [#allocation3], %s350
        %p352 = scmp.lt.s32.totalorder %s25, 1
        %s353 = scalar_select %p352, %s25, 1
        %s354 = smul.addr %s353, 8
        %s355 = scalar_lea.vmem %s1, %s354
        %v356 = vld [vmem:[%s355] sm:$0xff]
        %s357 = sld [smem:[#allocation2]]
        %vm358 = vcmask 261120
        %v359 = vsel %vm358, %v356, 0.0
        %360 = vadd.xlane.f32.xlu0 %v359
        %v361 = vpop.xlane.xlu0 %360
        %v362 = vrcp.pop 32.0
        %v363 = vmul.f32 %v361, %v362
        %v364 = vsub.f32 %v356, %v363
        %v365 = vmul.f32 %v364, %v364
        %v366 = vsel %vm358, %v365, 0.0
        %367 = vadd.xlane.f32.xlu0 %v366
        %v368 = vpop.xlane.xlu0 %367
        %v369 = vmul.f32 %v368, %v362
        %v370 = vadd.f32 %v369, 1e-05
        %v371 = vrsqrt.pop %v370
        %v372 = vmul.f32 %v364, %v371
        %v373 = vld [vmem:[%s2] sm:$0xff]
        %v374 = vld [vmem:[%s2 + $0x8] sm:$0xff]
        %v375 = vld [vmem:[%s2 + $0x10] sm:$0xff]
        %v376 = vld [vmem:[%s2 + $0x18] sm:$0xff]
        %v377 = vld [vmem:[%s3] sm:$0x1]
        %v379 = vlaneseq
        %v380 = vshrl.u32 %v379, 7
        %v381 = vsub.s32 0, %v380
        %v382 = vrot.slane %v377, %v381
        %v385 = vsel %vm358, %v372, 0
        %387 = vmatprep.subr.mxu0 0.0
        %388 = vmatpush1.msra.mxu0 %v373
        %389 = vmatprep.subr.mxu0 0.0
        %390 = vmatpush1.msra.mxu0 %v374
        %391 = vmatprep.subr.mxu0 0.0
        %392 = vmatpush1.msra.mxu0 %v375
        %393 = vmatprep.subr.mxu0 0.0
        %394 = vmatpush1.msra.mxu0 %v376
        %395 = vmatprep.subr.mxu0 0.0
        %396 = vmatpush1.msra.mxu0 0.0
        %397 = vmatprep.subr.mxu0 0.0
        %398 = vmatpush1.msra.mxu0 0.0
        %399 = vmatprep.subr.mxu0 0.0
        %400 = vmatpush1.msra.mxu0 0.0
        %401 = vmatprep.subr.mxu0 0.0
        %402 = vmatpush1.msra.mxu0 0.0
        %403 = vmatprep.subr.mxu0 0.0
        %404 = vmatpush1.msra.mxu0 0.0
        %405 = vmatprep.subr.mxu0 0.0
        %406 = vmatpush1.msra.mxu0 0.0
        %407 = vmatprep.subr.mxu0 0.0
        %408 = vmatpush1.msra.mxu0 0.0
        %409 = vmatprep.subr.mxu0 0.0
        %410 = vmatpush1.msra.mxu0 0.0
        %411 = vmatprep.subr.mxu0 0.0
        %412 = vmatpush1.msra.mxu0 0.0
        %413 = vmatprep.subr.mxu0 0.0
        %414 = vmatpush1.msra.mxu0 0.0
        %415 = vmatprep.subr.mxu0 0.0
        %416 = vmatpush1.msra.mxu0 0.0
        %417 = vmatprep.subr.mxu0 0.0
        %418 = vmatpush1.msra.mxu0 0.0
        %419 = vmatprep.subr.mxu0 0.0
        %420 = vmatpush1.msra.mxu0 0.0
        %421 = vmatprep.subr.mxu0 0.0
        %422 = vmatpush1.msra.mxu0 0.0
        %423 = vmatprep.subr.mxu0 0.0
        %424 = vmatpush1.msra.mxu0 0.0
        %425 = vmatprep.subr.mxu0 0.0
        %426 = vmatpush1.msra.mxu0 0.0
        %427 = vmatprep.subr.mxu0 0.0
        %428 = vmatpush1.msra.mxu0 0.0
        %429 = vmatprep.subr.mxu0 0.0
        %430 = vmatpush1.msra.mxu0 0.0
        %431 = vmatprep.subr.mxu0 0.0
        %432 = vmatpush1.msra.mxu0 0.0
        %433 = vmatprep.subr.mxu0 0.0
        %434 = vmatpush1.msra.mxu0 0.0
        %435 = vmatprep.subr.mxu0 0.0
        %436 = vmatpush1.msra.mxu0 0.0
        %437 = vmatprep.subr.mxu0 0.0
        %438 = vmatpush1.msra.mxu0 0.0
        %439 = vmatprep.subr.mxu0 0.0
        %440 = vmatpush1.msra.mxu0 0.0
        %441 = vmatprep.subr.mxu0 0.0
        %442 = vmatpush1.msra.mxu0 0.0
        %443 = vmatprep.subr.mxu0 0.0
        %444 = vmatpush1.msra.mxu0 0.0
        %445 = vmatprep.subr.mxu0 0.0
        %446 = vmatpush1.msra.mxu0 0.0
        %447 = vmatprep.subr.mxu0 0.0
        %448 = vmatpush1.msra.mxu0 0.0
        %449 = vmatprep.subr.mxu0 0.0
        %450 = vmatpush1.msra.mxu0 0.0
        %451 = vmatprep.mubr.f32.mxu0 0.0
        %452 = vmatmul.mubr.f32.gmra.mrb[0].mxu0 %v385
        %v453 = vpop.f32.mrb[0].mxu0
        %v454 = vadd.f32 %v382, %v453
        %v455 = vpop.f32.mrb[0].mxu0
        %456 = vdwg.mxu0
        %458 = vrot.lane.b32.xlu0 %v454, 120
        %v459 = vpop.permute.xlu0 %458
        %461 = vrot.lane.b32.xlu0 %v454, 112
        %v462 = vpop.permute.xlu0 %461
        %464 = vrot.lane.b32.xlu0 %v454, 104
        %v465 = vpop.permute.xlu0 %464
        %467 = vrot.lane.b32.xlu0 %v454, 96
        %v468 = vpop.permute.xlu0 %467
        %470 = vrot.lane.b32.xlu0 %v454, 88
        %v471 = vpop.permute.xlu0 %470
        %473 = vrot.lane.b32.xlu0 %v454, 80
        %v474 = vpop.permute.xlu0 %473
        %476 = vrot.lane.b32.xlu0 %v454, 72
        %v477 = vpop.permute.xlu0 %476
        %479 = vrot.lane.b32.xlu0 %v454, 64
        %v480 = vpop.permute.xlu0 %479
        %482 = vrot.lane.b32.xlu0 %v454, 56
        %v483 = vpop.permute.xlu0 %482
        %485 = vrot.lane.b32.xlu0 %v454, 48
        %v486 = vpop.permute.xlu0 %485
        %488 = vrot.lane.b32.xlu0 %v454, 40
        %v489 = vpop.permute.xlu0 %488
        %v491 = vcombine.low %v454, %v462
        %v492 = vcombine.high %v454, %v462
        %v494 = vunpack.c.l.s4 1983009808
        %v495 = vunpack.c.0.s8 %v494
        %v496 = vlaneseq
        %v497 = vshrl.u32 %v496, 7
        %v498 = vsub.s32 %v495, %v497
        %v499 = vrot.slane %v491, %v498
        %v501 = vunpack.c.l.s4 1983009808
        %v502 = vunpack.c.0.s8 %v501
        %v503 = vlaneseq
        %v504 = vshrl.u32 %v503, 7
        %v505 = vsub.s32 %v502, %v504
        %v506 = vrot.slane %v492, %v505
        %v507 = vcombine.low %v459, %v465
        %v508 = vcombine.high %v459, %v465
        %v510 = vunpack.c.l.s4 1983009808
        %v511 = vunpack.c.0.s8 %v510
        %v512 = vlaneseq
        %v513 = vshrl.u32 %v512, 7
        %v514 = vsub.s32 %v511, %v513
        %v515 = vrot.slane %v507, %v514
        %v517 = vunpack.c.l.s4 1983009808
        %v518 = vunpack.c.0.s8 %v517
        %v519 = vlaneseq
        %v520 = vshrl.u32 %v519, 7
        %v521 = vsub.s32 %v518, %v520
        %v522 = vrot.slane %v508, %v521
        %v523 = vcombine.low %v468, %v474
        %v524 = vcombine.high %v468, %v474
        %v526 = vunpack.c.l.s4 1983009808
        %v527 = vunpack.c.0.s8 %v526
        %v528 = vlaneseq
        %v529 = vshrl.u32 %v528, 7
        %v530 = vsub.s32 %v527, %v529
        %v531 = vrot.slane %v523, %v530
        %v533 = vunpack.c.l.s4 1983009808
        %v534 = vunpack.c.0.s8 %v533
        %v535 = vlaneseq
        %v536 = vshrl.u32 %v535, 7
        %v537 = vsub.s32 %v534, %v536
        %v538 = vrot.slane %v524, %v537
        %v539 = vcombine.low %v471, %v477
        %v540 = vcombine.high %v471, %v477
        %v542 = vunpack.c.l.s4 1983009808
        %v543 = vunpack.c.0.s8 %v542
        %v544 = vlaneseq
        %v545 = vshrl.u32 %v544, 7
        %v546 = vsub.s32 %v543, %v545
        %v547 = vrot.slane %v539, %v546
        %v549 = vunpack.c.l.s4 1983009808
        %v550 = vunpack.c.0.s8 %v549
        %v551 = vlaneseq
        %v552 = vshrl.u32 %v551, 7
        %v553 = vsub.s32 %v550, %v552
        %v554 = vrot.slane %v540, %v553
        %v555 = vcombine.low %v499, %v515
        %v556 = vcombine.high %v499, %v515
        %v558 = vunpack.c.l.s4 1934713408
        %v559 = vunpack.c.0.s8 %v558
        %v560 = vlaneseq
        %v561 = vshrl.u32 %v560, 7
        %v562 = vsub.s32 %v559, %v561
        %v563 = vrot.slane %v555, %v562
        %v565 = vunpack.c.l.s4 1934713408
        %v566 = vunpack.c.0.s8 %v565
        %v567 = vlaneseq
        %v568 = vshrl.u32 %v567, 7
        %v569 = vsub.s32 %v566, %v568
        %v570 = vrot.slane %v556, %v569
        %v571 = vcombine.low %v506, %v522
        %v572 = vcombine.high %v506, %v522
        %v574 = vunpack.c.l.s4 1934713408
        %v575 = vunpack.c.0.s8 %v574
        %v576 = vlaneseq
        %v577 = vshrl.u32 %v576, 7
        %v578 = vsub.s32 %v575, %v577
        %v579 = vrot.slane %v571, %v578
        %v581 = vunpack.c.l.s4 1934713408
        %v582 = vunpack.c.0.s8 %v581
        %v583 = vlaneseq
        %v584 = vshrl.u32 %v583, 7
        %v585 = vsub.s32 %v582, %v584
        %v586 = vrot.slane %v572, %v585
        %v587 = vcombine.low %v531, %v547
        %v588 = vcombine.high %v531, %v547
        %v590 = vunpack.c.l.s4 1934713408
        %v591 = vunpack.c.0.s8 %v590
        %v592 = vlaneseq
        %v593 = vshrl.u32 %v592, 7
        %v594 = vsub.s32 %v591, %v593
        %v595 = vrot.slane %v587, %v594
        %v597 = vunpack.c.l.s4 1934713408
        %v598 = vunpack.c.0.s8 %v597
        %v599 = vlaneseq
        %v600 = vshrl.u32 %v599, 7
        %v601 = vsub.s32 %v598, %v600
        %v602 = vrot.slane %v588, %v601
        %v603 = vcombine.low %v538, %v554
        %v604 = vcombine.high %v538, %v554
        %v606 = vunpack.c.l.s4 1934713408
        %v607 = vunpack.c.0.s8 %v606
        %v608 = vlaneseq
        %v609 = vshrl.u32 %v608, 7
        %v610 = vsub.s32 %v607, %v609
        %v611 = vrot.slane %v603, %v610
        %v613 = vunpack.c.l.s4 1934713408
        %v614 = vunpack.c.0.s8 %v613
        %v615 = vlaneseq
        %v616 = vshrl.u32 %v615, 7
        %v617 = vsub.s32 %v614, %v616
        %v618 = vrot.slane %v604, %v617
        %v619 = vcombine.low %v563, %v595
        %v620 = vcombine.high %v563, %v595
        %v621 = vcombine.low %v570, %v602
        %v622 = vcombine.high %v570, %v602
        %v623 = vcombine.low %v579, %v611
        %v624 = vcombine.high %v579, %v611
        %v625 = vcombine.low %v586, %v618
        %v626 = vcombine.high %v586, %v618
        %v627 = vcombine.low %v480, %v486
        %v628 = vcombine.high %v480, %v486
        %v630 = vunpack.c.l.s4 1983009808
        %v631 = vunpack.c.0.s8 %v630
        %v632 = vlaneseq
        %v633 = vshrl.u32 %v632, 7
        %v634 = vsub.s32 %v631, %v633
        %v635 = vrot.slane %v627, %v634
        %v637 = vunpack.c.l.s4 1983009808
        %v638 = vunpack.c.0.s8 %v637
        %v639 = vlaneseq
        %v640 = vshrl.u32 %v639, 7
        %v641 = vsub.s32 %v638, %v640
        %v642 = vrot.slane %v628, %v641
        %v643 = vcombine.low %v483, %v489
        %v644 = vcombine.high %v483, %v489
        %v646 = vunpack.c.l.s4 1983009808
        %v647 = vunpack.c.0.s8 %v646
        %v648 = vlaneseq
        %v649 = vshrl.u32 %v648, 7
        %v650 = vsub.s32 %v647, %v649
        %v651 = vrot.slane %v643, %v650
        %v653 = vunpack.c.l.s4 1983009808
        %v654 = vunpack.c.0.s8 %v653
        %v655 = vlaneseq
        %v656 = vshrl.u32 %v655, 7
        %v657 = vsub.s32 %v654, %v656
        %v658 = vrot.slane %v644, %v657
        %v659 = vcombine.low %v635, %v651
        %v660 = vcombine.high %v635, %v651
        %v662 = vunpack.c.l.s4 1934713408
        %v663 = vunpack.c.0.s8 %v662
        %v664 = vlaneseq
        %v665 = vshrl.u32 %v664, 7
        %v666 = vsub.s32 %v663, %v665
        %v667 = vrot.slane %v659, %v666
        %v669 = vunpack.c.l.s4 1934713408
        %v670 = vunpack.c.0.s8 %v669
        %v671 = vlaneseq
        %v672 = vshrl.u32 %v671, 7
        %v673 = vsub.s32 %v670, %v672
        %v674 = vrot.slane %v660, %v673
        %v675 = vcombine.low %v642, %v658
        %v676 = vcombine.high %v642, %v658
        %v678 = vunpack.c.l.s4 1934713408
        %v679 = vunpack.c.0.s8 %v678
        %v680 = vlaneseq
        %v681 = vshrl.u32 %v680, 7
        %v682 = vsub.s32 %v679, %v681
        %v683 = vrot.slane %v675, %v682
        %v685 = vunpack.c.l.s4 1934713408
        %v686 = vunpack.c.0.s8 %v685
        %v687 = vlaneseq
        %v688 = vshrl.u32 %v687, 7
        %v689 = vsub.s32 %v686, %v688
        %v690 = vrot.slane %v676, %v689
        %v691 = vcombine.high %v667, 0.0
        %v692 = vcombine.high %v674, 0.0
        %v693 = vcombine.high %v683, 0.0
        %v694 = vcombine.high %v690, 0.0
        %v695 = vcombine.low %v619, %v621
        %v696 = vcombine.high %v619, %v621
        %v698 = vunpack.c.l.s4 1983009808
        %v699 = vunpack.c.0.s8 %v698
        %v700 = vlaneseq
        %v701 = vshrl.u32 %v700, 7
        %v702 = vsub.s32 %v699, %v701
        %v703 = vrot.slane %v695, %v702
        %v705 = vunpack.c.l.s4 1983009808
        %v706 = vunpack.c.0.s8 %v705
        %v707 = vlaneseq
        %v708 = vshrl.u32 %v707, 7
        %v709 = vsub.s32 %v706, %v708
        %v710 = vrot.slane %v696, %v709
        %v711 = vcombine.low %v620, %v622
        %v712 = vcombine.high %v620, %v622
        %v714 = vunpack.c.l.s4 1983009808
        %v715 = vunpack.c.0.s8 %v714
        %v716 = vlaneseq
        %v717 = vshrl.u32 %v716, 7
        %v718 = vsub.s32 %v715, %v717
        %v719 = vrot.slane %v711, %v718
        %v721 = vunpack.c.l.s4 1983009808
        %v722 = vunpack.c.0.s8 %v721
        %v723 = vlaneseq
        %v724 = vshrl.u32 %v723, 7
        %v725 = vsub.s32 %v722, %v724
        %v726 = vrot.slane %v712, %v725
        %v727 = vcombine.low %v623, %v625
        %v728 = vcombine.high %v623, %v625
        %v730 = vunpack.c.l.s4 1983009808
        %v731 = vunpack.c.0.s8 %v730
        %v732 = vlaneseq
        %v733 = vshrl.u32 %v732, 7
        %v734 = vsub.s32 %v731, %v733
        %v735 = vrot.slane %v727, %v734
        %v737 = vunpack.c.l.s4 1983009808
        %v738 = vunpack.c.0.s8 %v737
        %v739 = vlaneseq
        %v740 = vshrl.u32 %v739, 7
        %v741 = vsub.s32 %v738, %v740
        %v742 = vrot.slane %v728, %v741
        %v743 = vcombine.low %v624, %v626
        %v744 = vcombine.high %v624, %v626
        %v746 = vunpack.c.l.s4 1983009808
        %v747 = vunpack.c.0.s8 %v746
        %v748 = vlaneseq
        %v749 = vshrl.u32 %v748, 7
        %v750 = vsub.s32 %v747, %v749
        %v751 = vrot.slane %v743, %v750
        %v753 = vunpack.c.l.s4 1983009808
        %v754 = vunpack.c.0.s8 %v753
        %v755 = vlaneseq
        %v756 = vshrl.u32 %v755, 7
        %v757 = vsub.s32 %v754, %v756
        %v758 = vrot.slane %v744, %v757
        %v759 = vcombine.low %v703, %v719
        %v760 = vcombine.high %v703, %v719
        %v762 = vunpack.c.l.s4 1934713408
        %v763 = vunpack.c.0.s8 %v762
        %v764 = vlaneseq
        %v765 = vshrl.u32 %v764, 7
        %v766 = vsub.s32 %v763, %v765
        %v767 = vrot.slane %v759, %v766
        %v769 = vunpack.c.l.s4 1934713408
        %v770 = vunpack.c.0.s8 %v769
        %v771 = vlaneseq
        %v772 = vshrl.u32 %v771, 7
        %v773 = vsub.s32 %v770, %v772
        %v774 = vrot.slane %v760, %v773
        %v775 = vcombine.low %v710, %v726
        %v776 = vcombine.high %v710, %v726
        %v778 = vunpack.c.l.s4 1934713408
        %v779 = vunpack.c.0.s8 %v778
        %v780 = vlaneseq
        %v781 = vshrl.u32 %v780, 7
        %v782 = vsub.s32 %v779, %v781
        %v783 = vrot.slane %v775, %v782
        %v785 = vunpack.c.l.s4 1934713408
        %v786 = vunpack.c.0.s8 %v785
        %v787 = vlaneseq
        %v788 = vshrl.u32 %v787, 7
        %v789 = vsub.s32 %v786, %v788
        %v790 = vrot.slane %v776, %v789
        %v791 = vcombine.low %v735, %v751
        %v792 = vcombine.high %v735, %v751
        %v794 = vunpack.c.l.s4 1934713408
        %v795 = vunpack.c.0.s8 %v794
        %v796 = vlaneseq
        %v797 = vshrl.u32 %v796, 7
        %v798 = vsub.s32 %v795, %v797
        %v799 = vrot.slane %v791, %v798
        %v801 = vunpack.c.l.s4 1934713408
        %v802 = vunpack.c.0.s8 %v801
        %v803 = vlaneseq
        %v804 = vshrl.u32 %v803, 7
        %v805 = vsub.s32 %v802, %v804
        %v806 = vrot.slane %v792, %v805
        %v807 = vcombine.low %v742, %v758
        %v808 = vcombine.high %v742, %v758
        %v810 = vunpack.c.l.s4 1934713408
        %v811 = vunpack.c.0.s8 %v810
        %v812 = vlaneseq
        %v813 = vshrl.u32 %v812, 7
        %v814 = vsub.s32 %v811, %v813
        %v815 = vrot.slane %v807, %v814
        %v817 = vunpack.c.l.s4 1934713408
        %v818 = vunpack.c.0.s8 %v817
        %v819 = vlaneseq
        %v820 = vshrl.u32 %v819, 7
        %v821 = vsub.s32 %v818, %v820
        %v822 = vrot.slane %v808, %v821
        %v823 = vcombine.low %v767, %v799
        %v824 = vcombine.high %v767, %v799
        %v825 = vcombine.low %v774, %v806
        %v826 = vcombine.high %v774, %v806
        %v827 = vcombine.low %v783, %v815
        %v828 = vcombine.high %v783, %v815
        %v829 = vcombine.low %v790, %v822
        %v830 = vcombine.high %v790, %v822
        %v831 = vcombine.low %v667, %v674
        %v833 = vunpack.c.l.s4 1983009808
        %v834 = vunpack.c.0.s8 %v833
        %v835 = vlaneseq
        %v836 = vshrl.u32 %v835, 7
        %v837 = vsub.s32 %v834, %v836
        %v838 = vrot.slane %v831, %v837
        %v839 = vcombine.low %v691, %v692
        %v841 = vunpack.c.l.s4 1983009808
        %v842 = vunpack.c.0.s8 %v841
        %v843 = vlaneseq
        %v844 = vshrl.u32 %v843, 7
        %v845 = vsub.s32 %v842, %v844
        %v846 = vrot.slane %v839, %v845
        %v847 = vcombine.low %v683, %v690
        %v849 = vunpack.c.l.s4 1983009808
        %v850 = vunpack.c.0.s8 %v849
        %v851 = vlaneseq
        %v852 = vshrl.u32 %v851, 7
        %v853 = vsub.s32 %v850, %v852
        %v854 = vrot.slane %v847, %v853
        %v855 = vcombine.low %v693, %v694
        %v857 = vunpack.c.l.s4 1983009808
        %v858 = vunpack.c.0.s8 %v857
        %v859 = vlaneseq
        %v860 = vshrl.u32 %v859, 7
        %v861 = vsub.s32 %v858, %v860
        %v862 = vrot.slane %v855, %v861
        %v863 = vcombine.low %v838, %v846
        %v864 = vcombine.high %v838, %v846
        %v866 = vunpack.c.l.s4 1934713408
        %v867 = vunpack.c.0.s8 %v866
        %v868 = vlaneseq
        %v869 = vshrl.u32 %v868, 7
        %v870 = vsub.s32 %v867, %v869
        %v871 = vrot.slane %v863, %v870
        %v873 = vunpack.c.l.s4 1934713408
        %v874 = vunpack.c.0.s8 %v873
        %v875 = vlaneseq
        %v876 = vshrl.u32 %v875, 7
        %v877 = vsub.s32 %v874, %v876
        %v878 = vrot.slane %v864, %v877
        %v879 = vcombine.low %v854, %v862
        %v880 = vcombine.high %v854, %v862
        %v882 = vunpack.c.l.s4 1934713408
        %v883 = vunpack.c.0.s8 %v882
        %v884 = vlaneseq
        %v885 = vshrl.u32 %v884, 7
        %v886 = vsub.s32 %v883, %v885
        %v887 = vrot.slane %v879, %v886
        %v889 = vunpack.c.l.s4 1934713408
        %v890 = vunpack.c.0.s8 %v889
        %v891 = vlaneseq
        %v892 = vshrl.u32 %v891, 7
        %v893 = vsub.s32 %v890, %v892
        %v894 = vrot.slane %v880, %v893
        %v895 = vcombine.low %v871, %v887
        %v896 = vcombine.high %v871, %v887
        %v897 = vcombine.low %v878, %v894
        %v898 = vcombine.high %v878, %v894
        %vm899 = vcmask 64512
        %v901 = vsel %vm899, %v823, 0
        %v904 = vsel %vm899, %v827, 0
        %906 = vmatprep.subr.mxu0 0.0
        %907 = vmatpush1.xpose.msra.mxu0 %v904
        %908 = vmatprep.subr.mxu0 0.0
        %909 = vmatpush1.xpose.msra.mxu0 0.0
        %910 = vmatprep.subr.mxu0 0.0
        %911 = vmatpush1.xpose.msra.mxu0 0.0
        %912 = vmatprep.subr.mxu0 0.0
        %913 = vmatpush1.xpose.msra.mxu0 0.0
        %914 = vmatprep.subr.mxu0 0.0
        %915 = vmatpush1.xpose.msra.mxu0 0.0
        %916 = vmatprep.subr.mxu0 0.0
        %917 = vmatpush1.xpose.msra.mxu0 0.0
        %918 = vmatprep.subr.mxu0 0.0
        %919 = vmatpush1.xpose.msra.mxu0 0.0
        %920 = vmatprep.subr.mxu0 0.0
        %921 = vmatpush1.xpose.msra.mxu0 0.0
        %922 = vmatprep.subr.mxu0 0.0
        %923 = vmatpush1.xpose.msra.mxu0 0.0
        %924 = vmatprep.subr.mxu0 0.0
        %925 = vmatpush1.xpose.msra.mxu0 0.0
        %926 = vmatprep.subr.mxu0 0.0
        %927 = vmatpush1.xpose.msra.mxu0 0.0
        %928 = vmatprep.subr.mxu0 0.0
        %929 = vmatpush1.xpose.msra.mxu0 0.0
        %930 = vmatprep.subr.mxu0 0.0
        %931 = vmatpush1.xpose.msra.mxu0 0.0
        %932 = vmatprep.subr.mxu0 0.0
        %933 = vmatpush1.xpose.msra.mxu0 0.0
        %934 = vmatprep.subr.mxu0 0.0
        %935 = vmatpush1.xpose.msra.mxu0 0.0
        %936 = vmatprep.subr.mxu0 0.0
        %937 = vmatpush1.xpose.msra.mxu0 0.0
        %938 = vmatprep.subr.mxu0 0.0
        %939 = vmatpush1.xpose.msra.mxu0 0.0
        %940 = vmatprep.subr.mxu0 0.0
        %941 = vmatpush1.xpose.msra.mxu0 0.0
        %942 = vmatprep.subr.mxu0 0.0
        %943 = vmatpush1.xpose.msra.mxu0 0.0
        %944 = vmatprep.subr.mxu0 0.0
        %945 = vmatpush1.xpose.msra.mxu0 0.0
        %946 = vmatprep.subr.mxu0 0.0
        %947 = vmatpush1.xpose.msra.mxu0 0.0
        %948 = vmatprep.subr.mxu0 0.0
        %949 = vmatpush1.xpose.msra.mxu0 0.0
        %950 = vmatprep.subr.mxu0 0.0
        %951 = vmatpush1.xpose.msra.mxu0 0.0
        %952 = vmatprep.subr.mxu0 0.0
        %953 = vmatpush1.xpose.msra.mxu0 0.0
        %954 = vmatprep.subr.mxu0 0.0
        %955 = vmatpush1.xpose.msra.mxu0 0.0
        %956 = vmatprep.subr.mxu0 0.0
        %957 = vmatpush1.xpose.msra.mxu0 0.0
        %958 = vmatprep.subr.mxu0 0.0
        %959 = vmatpush1.xpose.msra.mxu0 0.0
        %960 = vmatprep.subr.mxu0 0.0
        %961 = vmatpush1.xpose.msra.mxu0 0.0
        %962 = vmatprep.subr.mxu0 0.0
        %963 = vmatpush1.xpose.msra.mxu0 0.0
        %964 = vmatprep.subr.mxu0 0.0
        %965 = vmatpush1.xpose.msra.mxu0 0.0
        %966 = vmatprep.subr.mxu0 0.0
        %967 = vmatpush1.xpose.msra.mxu0 0.0
        %968 = vmatprep.subr.mxu0 0.0
        %969 = vmatpush1.xpose.msra.mxu0 0.0
        %970 = vmatprep.mubr.f32.mxu0 0.0
        %971 = vmatmul.mubr.f32.gmra.mrb[0].mxu0 %v901
        %v972 = vpop.f32.mrb[0].mxu0
        %v973 = vadd.f32 0.0, %v972
        %v974 = vpop.f32.mrb[0].mxu0
        %975 = vdwg.mxu0
        %v977 = vsel %vm899, %v824, 0
        %v980 = vsel %vm899, %v828, 0
        %982 = vmatprep.subr.mxu0 0.0
        %983 = vmatpush1.xpose.msra.mxu0 %v980
        %984 = vmatprep.subr.mxu0 0.0
        %985 = vmatpush1.xpose.msra.mxu0 0.0
        %986 = vmatprep.subr.mxu0 0.0
        %987 = vmatpush1.xpose.msra.mxu0 0.0
        %988 = vmatprep.subr.mxu0 0.0
        %989 = vmatpush1.xpose.msra.mxu0 0.0
        %990 = vmatprep.subr.mxu0 0.0
        %991 = vmatpush1.xpose.msra.mxu0 0.0
        %992 = vmatprep.subr.mxu0 0.0
        %993 = vmatpush1.xpose.msra.mxu0 0.0
        %994 = vmatprep.subr.mxu0 0.0
        %995 = vmatpush1.xpose.msra.mxu0 0.0
        %996 = vmatprep.subr.mxu0 0.0
        %997 = vmatpush1.xpose.msra.mxu0 0.0
        %998 = vmatprep.subr.mxu0 0.0
        %999 = vmatpush1.xpose.msra.mxu0 0.0
        %1000 = vmatprep.subr.mxu0 0.0
        %1001 = vmatpush1.xpose.msra.mxu0 0.0
        %1002 = vmatprep.subr.mxu0 0.0
        %1003 = vmatpush1.xpose.msra.mxu0 0.0
        %1004 = vmatprep.subr.mxu0 0.0
        %1005 = vmatpush1.xpose.msra.mxu0 0.0
        %1006 = vmatprep.subr.mxu0 0.0
        %1007 = vmatpush1.xpose.msra.mxu0 0.0
        %1008 = vmatprep.subr.mxu0 0.0
        %1009 = vmatpush1.xpose.msra.mxu0 0.0
        %1010 = vmatprep.subr.mxu0 0.0
        %1011 = vmatpush1.xpose.msra.mxu0 0.0
        %1012 = vmatprep.subr.mxu0 0.0
        %1013 = vmatpush1.xpose.msra.mxu0 0.0
        %1014 = vmatprep.subr.mxu0 0.0
        %1015 = vmatpush1.xpose.msra.mxu0 0.0
        %1016 = vmatprep.subr.mxu0 0.0
        %1017 = vmatpush1.xpose.msra.mxu0 0.0
        %1018 = vmatprep.subr.mxu0 0.0
        %1019 = vmatpush1.xpose.msra.mxu0 0.0
        %1020 = vmatprep.subr.mxu0 0.0
        %1021 = vmatpush1.xpose.msra.mxu0 0.0
        %1022 = vmatprep.subr.mxu0 0.0
        %1023 = vmatpush1.xpose.msra.mxu0 0.0
        %1024 = vmatprep.subr.mxu0 0.0
        %1025 = vmatpush1.xpose.msra.mxu0 0.0
        %1026 = vmatprep.subr.mxu0 0.0
        %1027 = vmatpush1.xpose.msra.mxu0 0.0
        %1028 = vmatprep.subr.mxu0 0.0
        %1029 = vmatpush1.xpose.msra.mxu0 0.0
        %1030 = vmatprep.subr.mxu0 0.0
        %1031 = vmatpush1.xpose.msra.mxu0 0.0
        %1032 = vmatprep.subr.mxu0 0.0
        %1033 = vmatpush1.xpose.msra.mxu0 0.0
        %1034 = vmatprep.subr.mxu0 0.0
        %1035 = vmatpush1.xpose.msra.mxu0 0.0
        %1036 = vmatprep.subr.mxu0 0.0
        %1037 = vmatpush1.xpose.msra.mxu0 0.0
        %1038 = vmatprep.subr.mxu0 0.0
        %1039 = vmatpush1.xpose.msra.mxu0 0.0
        %1040 = vmatprep.subr.mxu0 0.0
        %1041 = vmatpush1.xpose.msra.mxu0 0.0
        %1042 = vmatprep.subr.mxu0 0.0
        %1043 = vmatpush1.xpose.msra.mxu0 0.0
        %1044 = vmatprep.subr.mxu0 0.0
        %1045 = vmatpush1.xpose.msra.mxu0 0.0
        %1046 = vmatprep.mubr.f32.mxu0 0.0
        %1047 = vmatmul.mubr.f32.gmra.mrb[0].mxu0 %v977
        %v1048 = vpop.f32.mrb[0].mxu0
        %v1049 = vadd.f32 0.0, %v1048
        %v1050 = vpop.f32.mrb[0].mxu0
        %1051 = vdwg.mxu0
        %v1053 = vsel %vm899, %v825, 0
        %v1056 = vsel %vm899, %v829, 0
        %1058 = vmatprep.subr.mxu0 0.0
        %1059 = vmatpush1.xpose.msra.mxu0 %v1056
        %1060 = vmatprep.subr.mxu0 0.0
        %1061 = vmatpush1.xpose.msra.mxu0 0.0
        %1062 = vmatprep.subr.mxu0 0.0
        %1063 = vmatpush1.xpose.msra.mxu0 0.0
        %1064 = vmatprep.subr.mxu0 0.0
        %1065 = vmatpush1.xpose.msra.mxu0 0.0
        %1066 = vmatprep.subr.mxu0 0.0
        %1067 = vmatpush1.xpose.msra.mxu0 0.0
        %1068 = vmatprep.subr.mxu0 0.0
        %1069 = vmatpush1.xpose.msra.mxu0 0.0
        %1070 = vmatprep.subr.mxu0 0.0
        %1071 = vmatpush1.xpose.msra.mxu0 0.0
        %1072 = vmatprep.subr.mxu0 0.0
        %1073 = vmatpush1.xpose.msra.mxu0 0.0
        %1074 = vmatprep.subr.mxu0 0.0
        %1075 = vmatpush1.xpose.msra.mxu0 0.0
        %1076 = vmatprep.subr.mxu0 0.0
        %1077 = vmatpush1.xpose.msra.mxu0 0.0
        %1078 = vmatprep.subr.mxu0 0.0
        %1079 = vmatpush1.xpose.msra.mxu0 0.0
        %1080 = vmatprep.subr.mxu0 0.0
        %1081 = vmatpush1.xpose.msra.mxu0 0.0
        %1082 = vmatprep.subr.mxu0 0.0
        %1083 = vmatpush1.xpose.msra.mxu0 0.0
        %1084 = vmatprep.subr.mxu0 0.0
        %1085 = vmatpush1.xpose.msra.mxu0 0.0
        %1086 = vmatprep.subr.mxu0 0.0
        %1087 = vmatpush1.xpose.msra.mxu0 0.0
        %1088 = vmatprep.subr.mxu0 0.0
        %1089 = vmatpush1.xpose.msra.mxu0 0.0
        %1090 = vmatprep.subr.mxu0 0.0
        %1091 = vmatpush1.xpose.msra.mxu0 0.0
        %1092 = vmatprep.subr.mxu0 0.0
        %1093 = vmatpush1.xpose.msra.mxu0 0.0
        %1094 = vmatprep.subr.mxu0 0.0
        %1095 = vmatpush1.xpose.msra.mxu0 0.0
        %1096 = vmatprep.subr.mxu0 0.0
        %1097 = vmatpush1.xpose.msra.mxu0 0.0
        %1098 = vmatprep.subr.mxu0 0.0
        %1099 = vmatpush1.xpose.msra.mxu0 0.0
        %1100 = vmatprep.subr.mxu0 0.0
        %1101 = vmatpush1.xpose.msra.mxu0 0.0
        %1102 = vmatprep.subr.mxu0 0.0
        %1103 = vmatpush1.xpose.msra.mxu0 0.0
        %1104 = vmatprep.subr.mxu0 0.0
        %1105 = vmatpush1.xpose.msra.mxu0 0.0
        %1106 = vmatprep.subr.mxu0 0.0
        %1107 = vmatpush1.xpose.msra.mxu0 0.0
        %1108 = vmatprep.subr.mxu0 0.0
        %1109 = vmatpush1.xpose.msra.mxu0 0.0
        %1110 = vmatprep.subr.mxu0 0.0
        %1111 = vmatpush1.xpose.msra.mxu0 0.0
        %1112 = vmatprep.subr.mxu0 0.0
        %1113 = vmatpush1.xpose.msra.mxu0 0.0
        %1114 = vmatprep.subr.mxu0 0.0
        %1115 = vmatpush1.xpose.msra.mxu0 0.0
        %1116 = vmatprep.subr.mxu0 0.0
        %1117 = vmatpush1.xpose.msra.mxu0 0.0
        %1118 = vmatprep.subr.mxu0 0.0
        %1119 = vmatpush1.xpose.msra.mxu0 0.0
        %1120 = vmatprep.subr.mxu0 0.0
        %1121 = vmatpush1.xpose.msra.mxu0 0.0
        %1122 = vmatprep.mubr.f32.mxu0 0.0
        %1123 = vmatmul.mubr.f32.gmra.mrb[0].mxu0 %v1053
        %v1124 = vpop.f32.mrb[0].mxu0
        %v1125 = vadd.f32 0.0, %v1124
        %v1126 = vpop.f32.mrb[0].mxu0
        %1127 = vdwg.mxu0
        %v1129 = vsel %vm899, %v826, 0
        %v1132 = vsel %vm899, %v830, 0
        %1134 = vmatprep.subr.mxu0 0.0
        %1135 = vmatpush1.xpose.msra.mxu0 %v1132
        %1136 = vmatprep.subr.mxu0 0.0
        %1137 = vmatpush1.xpose.msra.mxu0 0.0
        %1138 = vmatprep.subr.mxu0 0.0
        %1139 = vmatpush1.xpose.msra.mxu0 0.0
        %1140 = vmatprep.subr.mxu0 0.0
        %1141 = vmatpush1.xpose.msra.mxu0 0.0
        %1142 = vmatprep.subr.mxu0 0.0
        %1143 = vmatpush1.xpose.msra.mxu0 0.0
        %1144 = vmatprep.subr.mxu0 0.0
        %1145 = vmatpush1.xpose.msra.mxu0 0.0
        %1146 = vmatprep.subr.mxu0 0.0
        %1147 = vmatpush1.xpose.msra.mxu0 0.0
        %1148 = vmatprep.subr.mxu0 0.0
        %1149 = vmatpush1.xpose.msra.mxu0 0.0
        %1150 = vmatprep.subr.mxu0 0.0
        %1151 = vmatpush1.xpose.msra.mxu0 0.0
        %1152 = vmatprep.subr.mxu0 0.0
        %1153 = vmatpush1.xpose.msra.mxu0 0.0
        %1154 = vmatprep.subr.mxu0 0.0
        %1155 = vmatpush1.xpose.msra.mxu0 0.0
        %1156 = vmatprep.subr.mxu0 0.0
        %1157 = vmatpush1.xpose.msra.mxu0 0.0
        %1158 = vmatprep.subr.mxu0 0.0
        %1159 = vmatpush1.xpose.msra.mxu0 0.0
        %1160 = vmatprep.subr.mxu0 0.0
        %1161 = vmatpush1.xpose.msra.mxu0 0.0
        %1162 = vmatprep.subr.mxu0 0.0
        %1163 = vmatpush1.xpose.msra.mxu0 0.0
        %1164 = vmatprep.subr.mxu0 0.0
        %1165 = vmatpush1.xpose.msra.mxu0 0.0
        %1166 = vmatprep.subr.mxu0 0.0
        %1167 = vmatpush1.xpose.msra.mxu0 0.0
        %1168 = vmatprep.subr.mxu0 0.0
        %1169 = vmatpush1.xpose.msra.mxu0 0.0
        %1170 = vmatprep.subr.mxu0 0.0
        %1171 = vmatpush1.xpose.msra.mxu0 0.0
        %1172 = vmatprep.subr.mxu0 0.0
        %1173 = vmatpush1.xpose.msra.mxu0 0.0
        %1174 = vmatprep.subr.mxu0 0.0
        %1175 = vmatpush1.xpose.msra.mxu0 0.0
        %1176 = vmatprep.subr.mxu0 0.0
        %1177 = vmatpush1.xpose.msra.mxu0 0.0
        %1178 = vmatprep.subr.mxu0 0.0
        %1179 = vmatpush1.xpose.msra.mxu0 0.0
        %1180 = vmatprep.subr.mxu0 0.0
        %1181 = vmatpush1.xpose.msra.mxu0 0.0
        %1182 = vmatprep.subr.mxu0 0.0
        %1183 = vmatpush1.xpose.msra.mxu0 0.0
        %1184 = vmatprep.subr.mxu0 0.0
        %1185 = vmatpush1.xpose.msra.mxu0 0.0
        %1186 = vmatprep.subr.mxu0 0.0
        %1187 = vmatpush1.xpose.msra.mxu0 0.0
        %1188 = vmatprep.subr.mxu0 0.0
        %1189 = vmatpush1.xpose.msra.mxu0 0.0
        %1190 = vmatprep.subr.mxu0 0.0
        %1191 = vmatpush1.xpose.msra.mxu0 0.0
        %1192 = vmatprep.subr.mxu0 0.0
        %1193 = vmatpush1.xpose.msra.mxu0 0.0
        %1194 = vmatprep.subr.mxu0 0.0
        %1195 = vmatpush1.xpose.msra.mxu0 0.0
        %1196 = vmatprep.subr.mxu0 0.0
        %1197 = vmatpush1.xpose.msra.mxu0 0.0
        %1198 = vmatprep.mubr.f32.mxu0 0.0
        %1199 = vmatmul.mubr.f32.gmra.mrb[0].mxu0 %v1129
        %v1200 = vpop.f32.mrb[0].mxu0
        %v1201 = vadd.f32 0.0, %v1200
        %v1202 = vpop.f32.mrb[0].mxu0
        %1203 = vdwg.mxu0
        %v1204 = vstv %s357
        %v1205 = vmul.f32 %v973, %v1204
        %v1206 = vmul.f32 %v1049, %v1204
        %v1207 = vmul.f32 %v1125, %v1204
        %v1208 = vmul.f32 %v1201, %v1204
        %v1209 = vsel %vm899, %v1205, -inf
        %1210 = vmax.xlane.f32.xlu0 %v1209
        %v1211 = vpop.xlane.xlu0 %1210
        %v1212 = vsel %vm899, %v1206, -inf
        %1213 = vmax.xlane.f32.xlu0 %v1212
        %v1214 = vpop.xlane.xlu0 %1213
        %v1215 = vsel %vm899, %v1207, -inf
        %1216 = vmax.xlane.f32.xlu0 %v1215
        %v1217 = vpop.xlane.xlu0 %1216
        %v1218 = vsel %vm899, %v1208, -inf
        %1219 = vmax.xlane.f32.xlu0 %v1218
        %v1220 = vpop.xlane.xlu0 %1219
        %v1221 = vsub.f32 %v1205, %v1211
        %v1222 = vsub.f32 %v1206, %v1214
        %v1223 = vsub.f32 %v1207, %v1217
        %v1224 = vsub.f32 %v1208, %v1220
        %v1225 = vmul.f32 %v1221, 1.442695
        %v1226 = vpow.pop %v1225
        %v1227 = vmul.f32 %v1222, 1.442695
        %v1228 = vpow.pop %v1227
        %v1229 = vmul.f32 %v1223, 1.442695
        %v1230 = vpow.pop %v1229
        %v1231 = vmul.f32 %v1224, 1.442695
        %v1232 = vpow.pop %v1231
        %v1233 = vsel %vm899, %v1226, 0.0
        %1234 = vadd.xlane.f32.xlu0 %v1233
        %v1235 = vpop.xlane.xlu0 %1234
        %v1236 = vsel %vm899, %v1228, 0.0
        %1237 = vadd.xlane.f32.xlu0 %v1236
        %v1238 = vpop.xlane.xlu0 %1237
        %v1239 = vsel %vm899, %v1230, 0.0
        %1240 = vadd.xlane.f32.xlu0 %v1239
        %v1241 = vpop.xlane.xlu0 %1240
        %v1242 = vsel %vm899, %v1232, 0.0
        %1243 = vadd.xlane.f32.xlu0 %v1242
        %v1244 = vpop.xlane.xlu0 %1243
        %v1245 = vrcp.pop %v1235
        %v1246 = vrcp.pop %v1238
        %v1247 = vrcp.pop %v1241
        %v1248 = vrcp.pop %v1244
        %v1249 = vmul.f32 %v1226, %v1245
        %v1250 = vmul.f32 %v1228, %v1246
        %v1251 = vmul.f32 %v1230, %v1247
        %v1252 = vmul.f32 %v1232, %v1248
        %v1254 = vsel %vm899, %v1249, 0
        %1256 = vmatprep.subr.mxu0 0.0
        %1257 = vmatpush1.msra.mxu0 %v895
        %1258 = vmatprep.subr.mxu0 0.0
        %1259 = vmatpush1.msra.mxu0 0.0
        %1260 = vmatprep.subr.mxu0 0.0
        %1261 = vmatpush1.msra.mxu0 0.0
        %1262 = vmatprep.subr.mxu0 0.0
        %1263 = vmatpush1.msra.mxu0 0.0
        %1264 = vmatprep.subr.mxu0 0.0
        %1265 = vmatpush1.msra.mxu0 0.0
        %1266 = vmatprep.subr.mxu0 0.0
        %1267 = vmatpush1.msra.mxu0 0.0
        %1268 = vmatprep.subr.mxu0 0.0
        %1269 = vmatpush1.msra.mxu0 0.0
        %1270 = vmatprep.subr.mxu0 0.0
        %1271 = vmatpush1.msra.mxu0 0.0
        %1272 = vmatprep.subr.mxu0 0.0
        %1273 = vmatpush1.msra.mxu0 0.0
        %1274 = vmatprep.subr.mxu0 0.0
        %1275 = vmatpush1.msra.mxu0 0.0
        %1276 = vmatprep.subr.mxu0 0.0
        %1277 = vmatpush1.msra.mxu0 0.0
        %1278 = vmatprep.subr.mxu0 0.0
        %1279 = vmatpush1.msra.mxu0 0.0
        %1280 = vmatprep.subr.mxu0 0.0
        %1281 = vmatpush1.msra.mxu0 0.0
        %1282 = vmatprep.subr.mxu0 0.0
        %1283 = vmatpush1.msra.mxu0 0.0
        %1284 = vmatprep.subr.mxu0 0.0
        %1285 = vmatpush1.msra.mxu0 0.0
        %1286 = vmatprep.subr.mxu0 0.0
        %1287 = vmatpush1.msra.mxu0 0.0
        %1288 = vmatprep.subr.mxu0 0.0
        %1289 = vmatpush1.msra.mxu0 0.0
        %1290 = vmatprep.subr.mxu0 0.0
        %1291 = vmatpush1.msra.mxu0 0.0
        %1292 = vmatprep.subr.mxu0 0.0
        %1293 = vmatpush1.msra.mxu0 0.0
        %1294 = vmatprep.subr.mxu0 0.0
        %1295 = vmatpush1.msra.mxu0 0.0
        %1296 = vmatprep.subr.mxu0 0.0
        %1297 = vmatpush1.msra.mxu0 0.0
        %1298 = vmatprep.subr.mxu0 0.0
        %1299 = vmatpush1.msra.mxu0 0.0
        %1300 = vmatprep.subr.mxu0 0.0
        %1301 = vmatpush1.msra.mxu0 0.0
        %1302 = vmatprep.subr.mxu0 0.0
        %1303 = vmatpush1.msra.mxu0 0.0
        %1304 = vmatprep.subr.mxu0 0.0
        %1305 = vmatpush1.msra.mxu0 0.0
        %1306 = vmatprep.subr.mxu0 0.0
        %1307 = vmatpush1.msra.mxu0 0.0
        %1308 = vmatprep.subr.mxu0 0.0
        %1309 = vmatpush1.msra.mxu0 0.0
        %1310 = vmatprep.subr.mxu0 0.0
        %1311 = vmatpush1.msra.mxu0 0.0
        %1312 = vmatprep.subr.mxu0 0.0
        %1313 = vmatpush1.msra.mxu0 0.0
        %1314 = vmatprep.subr.mxu0 0.0
        %1315 = vmatpush1.msra.mxu0 0.0
        %1316 = vmatprep.subr.mxu0 0.0
        %1317 = vmatpush1.msra.mxu0 0.0
        %1318 = vmatprep.subr.mxu0 0.0
        %1319 = vmatpush1.msra.mxu0 0.0
        %1320 = vmatprep.mubr.f32.mxu0 0.0
        %1321 = vmatmul.mubr.f32.gmra.mrb[0].mxu0 %v1254
        %v1322 = vpop.f32.mrb[0].mxu0
        %v1323 = vadd.f32 0.0, %v1322
        %v1324 = vpop.f32.mrb[0].mxu0
        %1325 = vdwg.mxu0
        %v1327 = vsel %vm899, %v1250, 0
        %1329 = vmatprep.subr.mxu0 0.0
        %1330 = vmatpush1.msra.mxu0 %v896
        %1331 = vmatprep.subr.mxu0 0.0
        %1332 = vmatpush1.msra.mxu0 0.0
        %1333 = vmatprep.subr.mxu0 0.0
        %1334 = vmatpush1.msra.mxu0 0.0
        %1335 = vmatprep.subr.mxu0 0.0
        %1336 = vmatpush1.msra.mxu0 0.0
        %1337 = vmatprep.subr.mxu0 0.0
        %1338 = vmatpush1.msra.mxu0 0.0
        %1339 = vmatprep.subr.mxu0 0.0
        %1340 = vmatpush1.msra.mxu0 0.0
        %1341 = vmatprep.subr.mxu0 0.0
        %1342 = vmatpush1.msra.mxu0 0.0
        %1343 = vmatprep.subr.mxu0 0.0
        %1344 = vmatpush1.msra.mxu0 0.0
        %1345 = vmatprep.subr.mxu0 0.0
        %1346 = vmatpush1.msra.mxu0 0.0
        %1347 = vmatprep.subr.mxu0 0.0
        %1348 = vmatpush1.msra.mxu0 0.0
        %1349 = vmatprep.subr.mxu0 0.0
        %1350 = vmatpush1.msra.mxu0 0.0
        %1351 = vmatprep.subr.mxu0 0.0
        %1352 = vmatpush1.msra.mxu0 0.0
        %1353 = vmatprep.subr.mxu0 0.0
        %1354 = vmatpush1.msra.mxu0 0.0
        %1355 = vmatprep.subr.mxu0 0.0
        %1356 = vmatpush1.msra.mxu0 0.0
        %1357 = vmatprep.subr.mxu0 0.0
        %1358 = vmatpush1.msra.mxu0 0.0
        %1359 = vmatprep.subr.mxu0 0.0
        %1360 = vmatpush1.msra.mxu0 0.0
        %1361 = vmatprep.subr.mxu0 0.0
        %1362 = vmatpush1.msra.mxu0 0.0
        %1363 = vmatprep.subr.mxu0 0.0
        %1364 = vmatpush1.msra.mxu0 0.0
        %1365 = vmatprep.subr.mxu0 0.0
        %1366 = vmatpush1.msra.mxu0 0.0
        %1367 = vmatprep.subr.mxu0 0.0
        %1368 = vmatpush1.msra.mxu0 0.0
        %1369 = vmatprep.subr.mxu0 0.0
        %1370 = vmatpush1.msra.mxu0 0.0
        %1371 = vmatprep.subr.mxu0 0.0
        %1372 = vmatpush1.msra.mxu0 0.0
        %1373 = vmatprep.subr.mxu0 0.0
        %1374 = vmatpush1.msra.mxu0 0.0
        %1375 = vmatprep.subr.mxu0 0.0
        %1376 = vmatpush1.msra.mxu0 0.0
        %1377 = vmatprep.subr.mxu0 0.0
        %1378 = vmatpush1.msra.mxu0 0.0
        %1379 = vmatprep.subr.mxu0 0.0
        %1380 = vmatpush1.msra.mxu0 0.0
        %1381 = vmatprep.subr.mxu0 0.0
        %1382 = vmatpush1.msra.mxu0 0.0
        %1383 = vmatprep.subr.mxu0 0.0
        %1384 = vmatpush1.msra.mxu0 0.0
        %1385 = vmatprep.subr.mxu0 0.0
        %1386 = vmatpush1.msra.mxu0 0.0
        %1387 = vmatprep.subr.mxu0 0.0
        %1388 = vmatpush1.msra.mxu0 0.0
        %1389 = vmatprep.subr.mxu0 0.0
        %1390 = vmatpush1.msra.mxu0 0.0
        %1391 = vmatprep.subr.mxu0 0.0
        %1392 = vmatpush1.msra.mxu0 0.0
        %1393 = vmatprep.mubr.f32.mxu0 0.0
        %1394 = vmatmul.mubr.f32.gmra.mrb[0].mxu0 %v1327
        %v1395 = vpop.f32.mrb[0].mxu0
        %v1396 = vadd.f32 0.0, %v1395
        %v1397 = vpop.f32.mrb[0].mxu0
        %1398 = vdwg.mxu0
        %v1400 = vsel %vm899, %v1251, 0
        %1402 = vmatprep.subr.mxu0 0.0
        %1403 = vmatpush1.msra.mxu0 %v897
        %1404 = vmatprep.subr.mxu0 0.0
        %1405 = vmatpush1.msra.mxu0 0.0
        %1406 = vmatprep.subr.mxu0 0.0
        %1407 = vmatpush1.msra.mxu0 0.0
        %1408 = vmatprep.subr.mxu0 0.0
        %1409 = vmatpush1.msra.mxu0 0.0
        %1410 = vmatprep.subr.mxu0 0.0
        %1411 = vmatpush1.msra.mxu0 0.0
        %1412 = vmatprep.subr.mxu0 0.0
        %1413 = vmatpush1.msra.mxu0 0.0
        %1414 = vmatprep.subr.mxu0 0.0
        %1415 = vmatpush1.msra.mxu0 0.0
        %1416 = vmatprep.subr.mxu0 0.0
        %1417 = vmatpush1.msra.mxu0 0.0
        %1418 = vmatprep.subr.mxu0 0.0
        %1419 = vmatpush1.msra.mxu0 0.0
        %1420 = vmatprep.subr.mxu0 0.0
        %1421 = vmatpush1.msra.mxu0 0.0
        %1422 = vmatprep.subr.mxu0 0.0
        %1423 = vmatpush1.msra.mxu0 0.0
        %1424 = vmatprep.subr.mxu0 0.0
        %1425 = vmatpush1.msra.mxu0 0.0
        %1426 = vmatprep.subr.mxu0 0.0
        %1427 = vmatpush1.msra.mxu0 0.0
        %1428 = vmatprep.subr.mxu0 0.0
        %1429 = vmatpush1.msra.mxu0 0.0
        %1430 = vmatprep.subr.mxu0 0.0
        %1431 = vmatpush1.msra.mxu0 0.0
        %1432 = vmatprep.subr.mxu0 0.0
        %1433 = vmatpush1.msra.mxu0 0.0
        %1434 = vmatprep.subr.mxu0 0.0
        %1435 = vmatpush1.msra.mxu0 0.0
        %1436 = vmatprep.subr.mxu0 0.0
        %1437 = vmatpush1.msra.mxu0 0.0
        %1438 = vmatprep.subr.mxu0 0.0
        %1439 = vmatpush1.msra.mxu0 0.0
        %1440 = vmatprep.subr.mxu0 0.0
        %1441 = vmatpush1.msra.mxu0 0.0
        %1442 = vmatprep.subr.mxu0 0.0
        %1443 = vmatpush1.msra.mxu0 0.0
        %1444 = vmatprep.subr.mxu0 0.0
        %1445 = vmatpush1.msra.mxu0 0.0
        %1446 = vmatprep.subr.mxu0 0.0
        %1447 = vmatpush1.msra.mxu0 0.0
        %1448 = vmatprep.subr.mxu0 0.0
        %1449 = vmatpush1.msra.mxu0 0.0
        %1450 = vmatprep.subr.mxu0 0.0
        %1451 = vmatpush1.msra.mxu0 0.0
        %1452 = vmatprep.subr.mxu0 0.0
        %1453 = vmatpush1.msra.mxu0 0.0
        %1454 = vmatprep.subr.mxu0 0.0
        %1455 = vmatpush1.msra.mxu0 0.0
        %1456 = vmatprep.subr.mxu0 0.0
        %1457 = vmatpush1.msra.mxu0 0.0
        %1458 = vmatprep.subr.mxu0 0.0
        %1459 = vmatpush1.msra.mxu0 0.0
        %1460 = vmatprep.subr.mxu0 0.0
        %1461 = vmatpush1.msra.mxu0 0.0
        %1462 = vmatprep.subr.mxu0 0.0
        %1463 = vmatpush1.msra.mxu0 0.0
        %1464 = vmatprep.subr.mxu0 0.0
        %1465 = vmatpush1.msra.mxu0 0.0
        %1466 = vmatprep.mubr.f32.mxu0 0.0
        %1467 = vmatmul.mubr.f32.gmra.mrb[0].mxu0 %v1400
        %v1468 = vpop.f32.mrb[0].mxu0
        %v1469 = vadd.f32 0.0, %v1468
        %v1470 = vpop.f32.mrb[0].mxu0
        %1471 = vdwg.mxu0
        %v1473 = vsel %vm899, %v1252, 0
        %1475 = vmatprep.subr.mxu0 0.0
        %1476 = vmatpush1.msra.mxu0 %v898
        %1477 = vmatprep.subr.mxu0 0.0
        %1478 = vmatpush1.msra.mxu0 0.0
        %1479 = vmatprep.subr.mxu0 0.0
        %1480 = vmatpush1.msra.mxu0 0.0
        %1481 = vmatprep.subr.mxu0 0.0
        %1482 = vmatpush1.msra.mxu0 0.0
        %1483 = vmatprep.subr.mxu0 0.0
        %1484 = vmatpush1.msra.mxu0 0.0
        %1485 = vmatprep.subr.mxu0 0.0
        %1486 = vmatpush1.msra.mxu0 0.0
        %1487 = vmatprep.subr.mxu0 0.0
        %1488 = vmatpush1.msra.mxu0 0.0
        %1489 = vmatprep.subr.mxu0 0.0
        %1490 = vmatpush1.msra.mxu0 0.0
        %1491 = vmatprep.subr.mxu0 0.0
        %1492 = vmatpush1.msra.mxu0 0.0
        %1493 = vmatprep.subr.mxu0 0.0
        %1494 = vmatpush1.msra.mxu0 0.0
        %1495 = vmatprep.subr.mxu0 0.0
        %1496 = vmatpush1.msra.mxu0 0.0
        %1497 = vmatprep.subr.mxu0 0.0
        %1498 = vmatpush1.msra.mxu0 0.0
        %1499 = vmatprep.subr.mxu0 0.0
        %1500 = vmatpush1.msra.mxu0 0.0
        %1501 = vmatprep.subr.mxu0 0.0
        %1502 = vmatpush1.msra.mxu0 0.0
        %1503 = vmatprep.subr.mxu0 0.0
        %1504 = vmatpush1.msra.mxu0 0.0
        %1505 = vmatprep.subr.mxu0 0.0
        %1506 = vmatpush1.msra.mxu0 0.0
        %1507 = vmatprep.subr.mxu0 0.0
        %1508 = vmatpush1.msra.mxu0 0.0
        %1509 = vmatprep.subr.mxu0 0.0
        %1510 = vmatpush1.msra.mxu0 0.0
        %1511 = vmatprep.subr.mxu0 0.0
        %1512 = vmatpush1.msra.mxu0 0.0
        %1513 = vmatprep.subr.mxu0 0.0
        %1514 = vmatpush1.msra.mxu0 0.0
        %1515 = vmatprep.subr.mxu0 0.0
        %1516 = vmatpush1.msra.mxu0 0.0
        %1517 = vmatprep.subr.mxu0 0.0
        %1518 = vmatpush1.msra.mxu0 0.0
        %1519 = vmatprep.subr.mxu0 0.0
        %1520 = vmatpush1.msra.mxu0 0.0
        %1521 = vmatprep.subr.mxu0 0.0
        %1522 = vmatpush1.msra.mxu0 0.0
        %1523 = vmatprep.subr.mxu0 0.0
        %1524 = vmatpush1.msra.mxu0 0.0
        %1525 = vmatprep.subr.mxu0 0.0
        %1526 = vmatpush1.msra.mxu0 0.0
        %1527 = vmatprep.subr.mxu0 0.0
        %1528 = vmatpush1.msra.mxu0 0.0
        %1529 = vmatprep.subr.mxu0 0.0
        %1530 = vmatpush1.msra.mxu0 0.0
        %1531 = vmatprep.subr.mxu0 0.0
        %1532 = vmatpush1.msra.mxu0 0.0
        %1533 = vmatprep.subr.mxu0 0.0
        %1534 = vmatpush1.msra.mxu0 0.0
        %1535 = vmatprep.subr.mxu0 0.0
        %1536 = vmatpush1.msra.mxu0 0.0
        %1537 = vmatprep.subr.mxu0 0.0
        %1538 = vmatpush1.msra.mxu0 0.0
        %1539 = vmatprep.mubr.f32.mxu0 0.0
        %1540 = vmatmul.mubr.f32.gmra.mrb[0].mxu0 %v1473
        %v1541 = vpop.f32.mrb[0].mxu0
        %v1542 = vadd.f32 0.0, %v1541
        %v1543 = vpop.f32.mrb[0].mxu0
        %1544 = vdwg.mxu0
        %v1545 = vcombine.low %v1323, %v1469
        %v1546 = vcombine.high %v1323, %v1469
        %v1548 = vunpack.c.l.s4 1983009808
        %v1549 = vunpack.c.0.s8 %v1548
        %v1550 = vlaneseq
        %v1551 = vshrl.u32 %v1550, 7
        %v1552 = vsub.s32 %v1549, %v1551
        %v1553 = vrot.slane %v1545, %v1552
        %v1555 = vunpack.c.l.s4 1983009808
        %v1556 = vunpack.c.0.s8 %v1555
        %v1557 = vlaneseq
        %v1558 = vshrl.u32 %v1557, 7
        %v1559 = vsub.s32 %v1556, %v1558
        %v1560 = vrot.slane %v1546, %v1559
        %v1561 = vcombine.low %v1396, %v1542
        %v1562 = vcombine.high %v1396, %v1542
        %v1564 = vunpack.c.l.s4 1983009808
        %v1565 = vunpack.c.0.s8 %v1564
        %v1566 = vlaneseq
        %v1567 = vshrl.u32 %v1566, 7
        %v1568 = vsub.s32 %v1565, %v1567
        %v1569 = vrot.slane %v1561, %v1568
        %v1571 = vunpack.c.l.s4 1983009808
        %v1572 = vunpack.c.0.s8 %v1571
        %v1573 = vlaneseq
        %v1574 = vshrl.u32 %v1573, 7
        %v1575 = vsub.s32 %v1572, %v1574
        %v1576 = vrot.slane %v1562, %v1575
        %v1577 = vcombine.low %v1553, %v1569
        %v1578 = vcombine.high %v1553, %v1569
        %v1580 = vunpack.c.l.s4 1934713408
        %v1581 = vunpack.c.0.s8 %v1580
        %v1582 = vlaneseq
        %v1583 = vshrl.u32 %v1582, 7
        %v1584 = vsub.s32 %v1581, %v1583
        %v1585 = vrot.slane %v1577, %v1584
        %v1587 = vunpack.c.l.s4 1934713408
        %v1588 = vunpack.c.0.s8 %v1587
        %v1589 = vlaneseq
        %v1590 = vshrl.u32 %v1589, 7
        %v1591 = vsub.s32 %v1588, %v1590
        %v1592 = vrot.slane %v1578, %v1591
        %v1593 = vcombine.low %v1560, %v1576
        %v1594 = vcombine.high %v1560, %v1576
        %v1596 = vunpack.c.l.s4 1934713408
        %v1597 = vunpack.c.0.s8 %v1596
        %v1598 = vlaneseq
        %v1599 = vshrl.u32 %v1598, 7
        %v1600 = vsub.s32 %v1597, %v1599
        %v1601 = vrot.slane %v1593, %v1600
        %v1603 = vunpack.c.l.s4 1934713408
        %v1604 = vunpack.c.0.s8 %v1603
        %v1605 = vlaneseq
        %v1606 = vshrl.u32 %v1605, 7
        %v1607 = vsub.s32 %v1604, %v1606
        %v1608 = vrot.slane %v1594, %v1607
        %v1609 = vcombine.high %v1585, 0.0
        %v1610 = vcombine.high %v1592, 0.0
        %v1611 = vcombine.high %v1601, 0.0
        %v1612 = vcombine.high %v1608, 0.0
        %v1613 = vcombine.low %v1585, %v1592
        %v1615 = vunpack.c.l.s4 1983009808
        %v1616 = vunpack.c.0.s8 %v1615
        %v1617 = vlaneseq
        %v1618 = vshrl.u32 %v1617, 7
        %v1619 = vsub.s32 %v1616, %v1618
        %v1620 = vrot.slane %v1613, %v1619
        %v1621 = vcombine.low %v1609, %v1610
        %v1623 = vunpack.c.l.s4 1983009808
        %v1624 = vunpack.c.0.s8 %v1623
        %v1625 = vlaneseq
        %v1626 = vshrl.u32 %v1625, 7
        %v1627 = vsub.s32 %v1624, %v1626
        %v1628 = vrot.slane %v1621, %v1627
        %v1629 = vcombine.low %v1601, %v1608
        %v1631 = vunpack.c.l.s4 1983009808
        %v1632 = vunpack.c.0.s8 %v1631
        %v1633 = vlaneseq
        %v1634 = vshrl.u32 %v1633, 7
        %v1635 = vsub.s32 %v1632, %v1634
        %v1636 = vrot.slane %v1629, %v1635
        %v1637 = vcombine.low %v1611, %v1612
        %v1639 = vunpack.c.l.s4 1983009808
        %v1640 = vunpack.c.0.s8 %v1639
        %v1641 = vlaneseq
        %v1642 = vshrl.u32 %v1641, 7
        %v1643 = vsub.s32 %v1640, %v1642
        %v1644 = vrot.slane %v1637, %v1643
        %v1645 = vcombine.low %v1620, %v1628
        %v1646 = vcombine.high %v1620, %v1628
        %v1648 = vunpack.c.l.s4 1934713408
        %v1649 = vunpack.c.0.s8 %v1648
        %v1650 = vlaneseq
        %v1651 = vshrl.u32 %v1650, 7
        %v1652 = vsub.s32 %v1649, %v1651
        %v1653 = vrot.slane %v1645, %v1652
        %v1655 = vunpack.c.l.s4 1934713408
        %v1656 = vunpack.c.0.s8 %v1655
        %v1657 = vlaneseq
        %v1658 = vshrl.u32 %v1657, 7
        %v1659 = vsub.s32 %v1656, %v1658
        %v1660 = vrot.slane %v1646, %v1659
        %v1661 = vcombine.low %v1636, %v1644
        %v1662 = vcombine.high %v1636, %v1644
        %v1664 = vunpack.c.l.s4 1934713408
        %v1665 = vunpack.c.0.s8 %v1664
        %v1666 = vlaneseq
        %v1667 = vshrl.u32 %v1666, 7
        %v1668 = vsub.s32 %v1665, %v1667
        %v1669 = vrot.slane %v1661, %v1668
        %v1671 = vunpack.c.l.s4 1934713408
        %v1672 = vunpack.c.0.s8 %v1671
        %v1673 = vlaneseq
        %v1674 = vshrl.u32 %v1673, 7
        %v1675 = vsub.s32 %v1672, %v1674
        %v1676 = vrot.slane %v1662, %v1675
        %v1677 = vcombine.low %v1653, %v1669
        %v1678 = vcombine.high %v1653, %v1669
        %v1679 = vcombine.low %v1660, %v1676
        %v1680 = vcombine.high %v1660, %v1676
        %1682 = vrot.lane.b32.xlu0 %v1678, 8
        %v1683 = vpop.permute.xlu0 %1682
        %1686 = vrot.lane.b32.xlu0 %v1679, 16
        %v1687 = vpop.permute.xlu0 %1686
        %1690 = vrot.lane.b32.xlu0 %v1680, 24
        %v1691 = vpop.permute.xlu0 %1690
        %v1693 = vsel %vm899, %v1677, %v1683
        %vm1694 = vcmask 130048
        %v1695 = vsel %vm1694, %v1693, %v1687
        %vm1696 = vcmask 195584
        %v1697 = vsel %vm1696, %v1695, %v1691
        %v1698 = vld [vmem:[%s4] sm:$0xff]
        %v1699 = vld [vmem:[%s4 + $0x8] sm:$0xff]
        %v1700 = vld [vmem:[%s4 + $0x10] sm:$0xff]
        %v1701 = vld [vmem:[%s4 + $0x18] sm:$0xff]
        %v1702 = vld [vmem:[%s5] sm:$0x1]
        %v1704 = vlaneseq
        %v1705 = vshrl.u32 %v1704, 7
        %v1706 = vsub.s32 0, %v1705
        %v1707 = vrot.slane %v1702, %v1706
        %v1710 = vsel %vm358, %v1697, 0
        %1712 = vmatprep.subr.mxu0 0.0
        %1713 = vmatpush1.msra.mxu0 %v1698
        %1714 = vmatprep.subr.mxu0 0.0
        %1715 = vmatpush1.msra.mxu0 %v1699
        %1716 = vmatprep.subr.mxu0 0.0
        %1717 = vmatpush1.msra.mxu0 %v1700
        %1718 = vmatprep.subr.mxu0 0.0
        %1719 = vmatpush1.msra.mxu0 %v1701
        %1720 = vmatprep.subr.mxu0 0.0
        %1721 = vmatpush1.msra.mxu0 0.0
        %1722 = vmatprep.subr.mxu0 0.0
        %1723 = vmatpush1.msra.mxu0 0.0
        %1724 = vmatprep.subr.mxu0 0.0
        %1725 = vmatpush1.msra.mxu0 0.0
        %1726 = vmatprep.subr.mxu0 0.0
        %1727 = vmatpush1.msra.mxu0 0.0
        %1728 = vmatprep.subr.mxu0 0.0
        %1729 = vmatpush1.msra.mxu0 0.0
        %1730 = vmatprep.subr.mxu0 0.0
        %1731 = vmatpush1.msra.mxu0 0.0
        %1732 = vmatprep.subr.mxu0 0.0
        %1733 = vmatpush1.msra.mxu0 0.0
        %1734 = vmatprep.subr.mxu0 0.0
        %1735 = vmatpush1.msra.mxu0 0.0
        %1736 = vmatprep.subr.mxu0 0.0
        %1737 = vmatpush1.msra.mxu0 0.0
        %1738 = vmatprep.subr.mxu0 0.0
        %1739 = vmatpush1.msra.mxu0 0.0
        %1740 = vmatprep.subr.mxu0 0.0
        %1741 = vmatpush1.msra.mxu0 0.0
        %1742 = vmatprep.subr.mxu0 0.0
        %1743 = vmatpush1.msra.mxu0 0.0
        %1744 = vmatprep.subr.mxu0 0.0
        %1745 = vmatpush1.msra.mxu0 0.0
        %1746 = vmatprep.subr.mxu0 0.0
        %1747 = vmatpush1.msra.mxu0 0.0
        %1748 = vmatprep.subr.mxu0 0.0
        %1749 = vmatpush1.msra.mxu0 0.0
        %1750 = vmatprep.subr.mxu0 0.0
        %1751 = vmatpush1.msra.mxu0 0.0
        %1752 = vmatprep.subr.mxu0 0.0
        %1753 = vmatpush1.msra.mxu0 0.0
        %1754 = vmatprep.subr.mxu0 0.0
        %1755 = vmatpush1.msra.mxu0 0.0
        %1756 = vmatprep.subr.mxu0 0.0
        %1757 = vmatpush1.msra.mxu0 0.0
        %1758 = vmatprep.subr.mxu0 0.0
        %1759 = vmatpush1.msra.mxu0 0.0
        %1760 = vmatprep.subr.mxu0 0.0
        %1761 = vmatpush1.msra.mxu0 0.0
        %1762 = vmatprep.subr.mxu0 0.0
        %1763 = vmatpush1.msra.mxu0 0.0
        %1764 = vmatprep.subr.mxu0 0.0
        %1765 = vmatpush1.msra.mxu0 0.0
        %1766 = vmatprep.subr.mxu0 0.0
        %1767 = vmatpush1.msra.mxu0 0.0
        %1768 = vmatprep.subr.mxu0 0.0
        %1769 = vmatpush1.msra.mxu0 0.0
        %1770 = vmatprep.subr.mxu0 0.0
        %1771 = vmatpush1.msra.mxu0 0.0
        %1772 = vmatprep.subr.mxu0 0.0
        %1773 = vmatpush1.msra.mxu0 0.0
        %1774 = vmatprep.subr.mxu0 0.0
        %1775 = vmatpush1.msra.mxu0 0.0
        %1776 = vmatprep.mubr.f32.mxu0 0.0
        %1777 = vmatmul.mubr.f32.gmra.mrb[0].mxu0 %v1710
        %v1778 = vpop.f32.mrb[0].mxu0
        %v1779 = vadd.f32 %v1707, %v1778
        %v1780 = vpop.f32.mrb[0].mxu0
        %1781 = vdwg.mxu0
        %v1782 = vadd.f32 %v356, %v1779
        %v1783 = vsel %vm358, %v1782, 0.0
        %1784 = vadd.xlane.f32.xlu0 %v1783
        %v1785 = vpop.xlane.xlu0 %1784
        %v1786 = vmul.f32 %v1785, %v362
        %v1787 = vsub.f32 %v1782, %v1786
        %v1788 = vmul.f32 %v1787, %v1787
        %v1789 = vsel %vm358, %v1788, 0.0
        %1790 = vadd.xlane.f32.xlu0 %v1789
        %v1791 = vpop.xlane.xlu0 %1790
        %v1792 = vmul.f32 %v1791, %v362
        %v1793 = vadd.f32 %v1792, 1e-05
        %v1794 = vrsqrt.pop %v1793
        %v1795 = vmul.f32 %v1787, %v1794
        %v1796 = vld [vmem:[%s6] sm:$0xff]
        %v1797 = vld [vmem:[%s6 + $0x8] sm:$0xff]
        %v1798 = vld [vmem:[%s6 + $0x10] sm:$0xff]
        %v1799 = vld [vmem:[%s6 + $0x18] sm:$0xff]
        %v1800 = vld [vmem:[%s7] sm:$0x1]
        %v1802 = vlaneseq
        %v1803 = vshrl.u32 %v1802, 7
        %v1804 = vsub.s32 0, %v1803
        %v1805 = vrot.slane %v1800, %v1804
        %v1808 = vsel %vm358, %v1795, 0
        %1810 = vmatprep.subr.mxu0 0.0
        %1811 = vmatpush1.msra.mxu0 %v1796
        %1812 = vmatprep.subr.mxu0 0.0
        %1813 = vmatpush1.msra.mxu0 %v1797
        %1814 = vmatprep.subr.mxu0 0.0
        %1815 = vmatpush1.msra.mxu0 %v1798
        %1816 = vmatprep.subr.mxu0 0.0
        %1817 = vmatpush1.msra.mxu0 %v1799
        %1818 = vmatprep.subr.mxu0 0.0
        %1819 = vmatpush1.msra.mxu0 0.0
        %1820 = vmatprep.subr.mxu0 0.0
        %1821 = vmatpush1.msra.mxu0 0.0
        %1822 = vmatprep.subr.mxu0 0.0
        %1823 = vmatpush1.msra.mxu0 0.0
        %1824 = vmatprep.subr.mxu0 0.0
        %1825 = vmatpush1.msra.mxu0 0.0
        %1826 = vmatprep.subr.mxu0 0.0
        %1827 = vmatpush1.msra.mxu0 0.0
        %1828 = vmatprep.subr.mxu0 0.0
        %1829 = vmatpush1.msra.mxu0 0.0
        %1830 = vmatprep.subr.mxu0 0.0
        %1831 = vmatpush1.msra.mxu0 0.0
        %1832 = vmatprep.subr.mxu0 0.0
        %1833 = vmatpush1.msra.mxu0 0.0
        %1834 = vmatprep.subr.mxu0 0.0
        %1835 = vmatpush1.msra.mxu0 0.0
        %1836 = vmatprep.subr.mxu0 0.0
        %1837 = vmatpush1.msra.mxu0 0.0
        %1838 = vmatprep.subr.mxu0 0.0
        %1839 = vmatpush1.msra.mxu0 0.0
        %1840 = vmatprep.subr.mxu0 0.0
        %1841 = vmatpush1.msra.mxu0 0.0
        %1842 = vmatprep.subr.mxu0 0.0
        %1843 = vmatpush1.msra.mxu0 0.0
        %1844 = vmatprep.subr.mxu0 0.0
        %1845 = vmatpush1.msra.mxu0 0.0
        %1846 = vmatprep.subr.mxu0 0.0
        %1847 = vmatpush1.msra.mxu0 0.0
        %1848 = vmatprep.subr.mxu0 0.0
        %1849 = vmatpush1.msra.mxu0 0.0
        %1850 = vmatprep.subr.mxu0 0.0
        %1851 = vmatpush1.msra.mxu0 0.0
        %1852 = vmatprep.subr.mxu0 0.0
        %1853 = vmatpush1.msra.mxu0 0.0
        %1854 = vmatprep.subr.mxu0 0.0
        %1855 = vmatpush1.msra.mxu0 0.0
        %1856 = vmatprep.subr.mxu0 0.0
        %1857 = vmatpush1.msra.mxu0 0.0
        %1858 = vmatprep.subr.mxu0 0.0
        %1859 = vmatpush1.msra.mxu0 0.0
        %1860 = vmatprep.subr.mxu0 0.0
        %1861 = vmatpush1.msra.mxu0 0.0
        %1862 = vmatprep.subr.mxu0 0.0
        %1863 = vmatpush1.msra.mxu0 0.0
        %1864 = vmatprep.subr.mxu0 0.0
        %1865 = vmatpush1.msra.mxu0 0.0
        %1866 = vmatprep.subr.mxu0 0.0
        %1867 = vmatpush1.msra.mxu0 0.0
        %1868 = vmatprep.subr.mxu0 0.0
        %1869 = vmatpush1.msra.mxu0 0.0
        %1870 = vmatprep.subr.mxu0 0.0
        %1871 = vmatpush1.msra.mxu0 0.0
        %1872 = vmatprep.subr.mxu0 0.0
        %1873 = vmatpush1.msra.mxu0 0.0
        %1874 = vmatprep.mubr.f32.mxu0 0.0
        %1875 = vmatmul.mubr.f32.gmra.mrb[0].mxu0 %v1808
        %v1876 = vpop.f32.mrb[0].mxu0
        %v1877 = vadd.f32 %v1805, %v1876
        %v1878 = vpop.f32.mrb[0].mxu0
        %1879 = vdwg.mxu0
        %v1880 = vmul.f32 %v1877, 0.5
        %v1881 = vrcp.pop 1.4142135
        %v1882 = vmul.f32 %v1877, %v1881
        %v1883 = verf.f32.pop %v1882
        %v1884 = vadd.f32 %v1883, 1.0
        %v1885 = vmul.f32 %v1880, %v1884
        %v1886 = vld [vmem:[%s8] sm:$0xff]
        %v1887 = vld [vmem:[%s8 + $0x8] sm:$0xff]
        %v1888 = vld [vmem:[%s8 + $0x10] sm:$0xff]
        %v1889 = vld [vmem:[%s8 + $0x18] sm:$0xff]
        %v1890 = vld [vmem:[%s8 + $0x20] sm:$0xff]
        %v1891 = vld [vmem:[%s8 + $0x28] sm:$0xff]
        %v1892 = vld [vmem:[%s8 + $0x30] sm:$0xff]
        %v1893 = vld [vmem:[%s8 + $0x38] sm:$0xff]
        %v1894 = vld [vmem:[%s8 + $0x40] sm:$0xff]
        %v1895 = vld [vmem:[%s8 + $0x48] sm:$0xff]
        %v1896 = vld [vmem:[%s8 + $0x50] sm:$0xff]
        %v1897 = vld [vmem:[%s8 + $0x58] sm:$0xff]
        %v1898 = vld [vmem:[%s8 + $0x60] sm:$0xff]
        %v1899 = vld [vmem:[%s8 + $0x68] sm:$0xff]
        %v1900 = vld [vmem:[%s8 + $0x70] sm:$0xff]
        %v1901 = vld [vmem:[%s8 + $0x78] sm:$0xff]
        %v1902 = vld [vmem:[%s9] sm:$0x1]
        %v1904 = vlaneseq
        %v1905 = vshrl.u32 %v1904, 7
        %v1906 = vsub.s32 0, %v1905
        %v1907 = vrot.slane %v1902, %v1906
        %1909 = vmatprep.subr.mxu0 0.0
        %1910 = vmatpush1.msra.mxu0 %v1886
        %1911 = vmatprep.subr.mxu0 0.0
        %1912 = vmatpush1.msra.mxu0 %v1887
        %1913 = vmatprep.subr.mxu0 0.0
        %1914 = vmatpush1.msra.mxu0 %v1888
        %1915 = vmatprep.subr.mxu0 0.0
        %1916 = vmatpush1.msra.mxu0 %v1889
        %1917 = vmatprep.subr.mxu0 0.0
        %1918 = vmatpush1.msra.mxu0 %v1890
        %1919 = vmatprep.subr.mxu0 0.0
        %1920 = vmatpush1.msra.mxu0 %v1891
        %1921 = vmatprep.subr.mxu0 0.0
        %1922 = vmatpush1.msra.mxu0 %v1892
        %1923 = vmatprep.subr.mxu0 0.0
        %1924 = vmatpush1.msra.mxu0 %v1893
        %1925 = vmatprep.subr.mxu0 0.0
        %1926 = vmatpush1.msra.mxu0 %v1894
        %1927 = vmatprep.subr.mxu0 0.0
        %1928 = vmatpush1.msra.mxu0 %v1895
        %1929 = vmatprep.subr.mxu0 0.0
        %1930 = vmatpush1.msra.mxu0 %v1896
        %1931 = vmatprep.subr.mxu0 0.0
        %1932 = vmatpush1.msra.mxu0 %v1897
        %1933 = vmatprep.subr.mxu0 0.0
        %1934 = vmatpush1.msra.mxu0 %v1898
        %1935 = vmatprep.subr.mxu0 0.0
        %1936 = vmatpush1.msra.mxu0 %v1899
        %1937 = vmatprep.subr.mxu0 0.0
        %1938 = vmatpush1.msra.mxu0 %v1900
        %1939 = vmatprep.subr.mxu0 0.0
        %1940 = vmatpush1.msra.mxu0 %v1901
        %1941 = vmatprep.subr.mxu0 0.0
        %1942 = vmatpush1.msra.mxu0 0.0
        %1943 = vmatprep.subr.mxu0 0.0
        %1944 = vmatpush1.msra.mxu0 0.0
        %1945 = vmatprep.subr.mxu0 0.0
        %1946 = vmatpush1.msra.mxu0 0.0
        %1947 = vmatprep.subr.mxu0 0.0
        %1948 = vmatpush1.msra.mxu0 0.0
        %1949 = vmatprep.subr.mxu0 0.0
        %1950 = vmatpush1.msra.mxu0 0.0
        %1951 = vmatprep.subr.mxu0 0.0
        %1952 = vmatpush1.msra.mxu0 0.0
        %1953 = vmatprep.subr.mxu0 0.0
        %1954 = vmatpush1.msra.mxu0 0.0
        %1955 = vmatprep.subr.mxu0 0.0
        %1956 = vmatpush1.msra.mxu0 0.0
        %1957 = vmatprep.subr.mxu0 0.0
        %1958 = vmatpush1.msra.mxu0 0.0
        %1959 = vmatprep.subr.mxu0 0.0
        %1960 = vmatpush1.msra.mxu0 0.0
        %1961 = vmatprep.subr.mxu0 0.0
        %1962 = vmatpush1.msra.mxu0 0.0
        %1963 = vmatprep.subr.mxu0 0.0
        %1964 = vmatpush1.msra.mxu0 0.0
        %1965 = vmatprep.subr.mxu0 0.0
        %1966 = vmatpush1.msra.mxu0 0.0
        %1967 = vmatprep.subr.mxu0 0.0
        %1968 = vmatpush1.msra.mxu0 0.0
        %1969 = vmatprep.subr.mxu0 0.0
        %1970 = vmatpush1.msra.mxu0 0.0
        %1971 = vmatprep.subr.mxu0 0.0
        %1972 = vmatpush1.msra.mxu0 0.0
        %1973 = vmatprep.mubr.f32.mxu0 0.0
        %1974 = vmatmul.mubr.f32.gmra.mrb[0].mxu0 %v1885
        %v1975 = vpop.f32.mrb[0].mxu0
        %v1976 = vadd.f32 %v1907, %v1975
        %v1977 = vpop.f32.mrb[0].mxu0
        %1978 = vdwg.mxu0
        %v1979 = vadd.f32 %v1782, %v1976
        %1980 = vst.msk [vmem:[%s351] sm:$0xff] %vm358, %v1979
        %s1981 = sand.u32 %s248, 1
        %s1982 = scalar_lea.sflag [#allocation4], %s1981
        %s1983 = sand.u32 %s248, 1
        %s1984 = smul.addr %s1983, 8
        %s1985 = scalar_lea.vmem [#allocation3], %s1984
        // Predicated region
        $region61: #{tpu_custom_call.1} parent=59 // pred_check
          %p1986 = pneg %p258
        $region62: #{tpu_custom_call.1} parent=59 // pred_check_branch
          %1988 = sbr.rel (%p1986) target = $region64
        $region63: #{tpu_custom_call.1} parent=59 // pred_region
          %s1990 = ssub.s32 128, 128
          %1991 = vsyncadd %s1982, %s1990
          %s1992 = smul.addr %s25, 128
          %s1993 = scalar_lea.hbm %s10, %s1992
          %s1995 = sshll.u32 %s1985, 4
          %s1996 = int_to_ptr.vmem [resolvable:$true] %s1995
          %1998 = dma.vmem_to_hbm [thread:$0]  %s1996, 128, %s1993, %s1982
        $region64: #{tpu_custom_call.1} parent=59 // pred_fallthru
          _
      $region60: #{tpu_custom_call.1} parent=5 // pred_fallthru
        _
      %p1999 = scmp.le.s32.totalorder 2, %s20
      // Predicated region
      $region65: #{tpu_custom_call.1} parent=5 // pred_check
        %p2000 = pneg %p1999
      $region66: #{tpu_custom_call.1} parent=5 // pred_check_branch
        %2002 = sbr.rel (%p2000) target = $region68
      $region67: #{tpu_custom_call.1} parent=5 // pred_region
        %s2003 = ssub.s32 %s20, 2
        // Predicated region
        $region69: #{tpu_custom_call.1} parent=67 // pred_check
          %p2004 = pneg %p264
        $region70: #{tpu_custom_call.1} parent=67 // pred_check_branch
          %2006 = sbr.rel (%p2004) target = $region72
        $region71: #{tpu_custom_call.1} parent=67 // pred_region
          %s2007 = sand.u32 %s249, 1
          %s2008 = scalar_lea.sflag [#allocation4], %s2007
          %s2009 = sand.u32 %s249, 1
          %s2010 = smul.addr %s2009, 8
          %s2011 = scalar_lea.vmem [#allocation3], %s2010
          %2012 = dma.done %s2008, 128
        $region72: #{tpu_custom_call.1} parent=67 // pred_fallthru
          _
      $region68: #{tpu_custom_call.1} parent=5 // pred_fallthru
        _
    $region6: #{tpu_custom_call.1} parent=1 // loop_footer
      %s24 = sadd.s32 1, %s20
    $region7: #{tpu_custom_call.1} parent=1 // loop_footer_branch
      %19 = sbr.rel target = $region3
    $region8: #{tpu_custom_call.1} parent=1 // loop_exit
      _
    %2013 = vsyncpa [#allocation4], 1
    %s2014 = scalar_lea.sflag [#allocation4], 1
    %2015 = vsyncpa %s2014, 1

</llo_original>
